<compile_context>
chip_gen: v7x
topology: tpu7x:2x2x1
jax: 0.10.0
libtpu: 0.0.40
codegen_flags: <defaults>
</compile_context>

<pallas_src>
import functools

import jax
import jax.numpy as jnp
from jax import lax
from jax.experimental import pallas as pl
from jax.experimental.pallas import tpu as pltpu


def _round_up(x, m):
    return ((x + m - 1) // m) * m


def _deepsets_stack_kernel(*refs, activation, n_layers, sets_per_block, set_size):
    """Fused forward for the whole DeepSets stack over one tile of sets.

    refs layout:
      refs[0]            : x_ref   [sets_per_block*set_size, D_in0]
      refs[1 + 3*l + 0]  : w_curr  [D_in_l, D_out_l]
      refs[1 + 3*l + 1]  : w_all   [D_in_l, D_out_l]
      refs[1 + 3*l + 2]  : b       [1, D_out_l]
      refs[-1]           : o_ref   [sets_per_block*set_size, D_out_pad]
    """
    x_ref = refs[0]
    o_ref = refs[-1]
    layer_refs = refs[1:-1]

    cdtype = x_ref.dtype
    rows = sets_per_block * set_size

    # 0/1 segment-sum matrix seg[t, r] = 1 iff row r belongs to set t, plus its
    # scatter counterpart scat[r, t].  Built from 2-D iotas + compares (no int
    # division); exact in bf16; reused by every layer.
    col = lax.broadcasted_iota(jnp.int32, (sets_per_block, rows), 1)
    lo = lax.broadcasted_iota(jnp.int32, (sets_per_block, rows), 0) * set_size
    seg = jnp.where((col >= lo) & (col < lo + set_size), 1.0, 0.0).astype(cdtype)
    row_id = lax.broadcasted_iota(jnp.int32, (rows, sets_per_block), 0)
    set_lo = lax.broadcasted_iota(jnp.int32, (rows, sets_per_block), 1) * set_size
    scat = jnp.where((row_id >= set_lo) & (row_id < set_lo + set_size),
                     1.0, 0.0).astype(cdtype)

    h = x_ref[...]                                                   # [rows, D_in]
    for li in range(n_layers):
        w_curr = layer_refs[3 * li][...]                             # [D_in, D_out]
        w_all = layer_refs[3 * li + 1][...]                          # [D_in, D_out]
        b = layer_refs[3 * li + 2][...]                              # [1, D_out]

        # fc_curr for every set element: one MXU pass over the whole tile.
        z_curr = jnp.dot(h, w_curr, preferred_element_type=jnp.float32)

        # fc_all: per-set sum FIRST (matches the reference FP order), then a
        # tiny [TB, D_in] @ [D_in, D_out] matmul, then scatter back to rows.
        pooled = jnp.dot(seg, h, preferred_element_type=jnp.float32)  # [TB, D_in]
        z_all = jnp.dot(pooled.astype(cdtype), w_all,
                        preferred_element_type=jnp.float32)           # [TB, D_out]
        z_rows = jnp.dot(scat, z_all.astype(cdtype),
                         preferred_element_type=jnp.float32)          # [rows, D_out]

        # f32 epilogue (bias + pooled term + activation) — friendly to v5e's
        # f32-only VPU/EUP, protects accuracy in the bf16 path.
        z = z_curr + z_rows + b.astype(jnp.float32)
        if activation == "relu":
            z = jnp.maximum(z, 0.0)
        elif activation == "tanh":
            z = jnp.tanh(z)
        # else: identity

        if li == n_layers - 1:
            o_ref[...] = z.astype(o_ref.dtype)       # lane-dense (padded) store
        else:
            h = z.astype(cdtype)                     # stays in vregs/VMEM


def pack_params(raw_params, compute_dtype=jnp.bfloat16):
    """Pack raw (w_curr, b_curr, w_all) tuples into the kernel layout.

    * cast once to compute_dtype (bf16 recommended: native MXU dtype, half DMA)
    * final layer zero-padded to a multiple of 128 output features so the HBM
      store is lane-dense; the forward wrapper slices the padding off.
    Returns (packed_list, out_dims).
    """
    n_layers = len(raw_params)
    out_dims = raw_params[-1][0].shape[1]
    packed = []
    for li, (w_curr, b_curr, w_all) in enumerate(raw_params):
        if li == n_layers - 1:
            d_out = w_curr.shape[1]
            d_pad = _round_up(d_out, 128)
            if d_pad != d_out:
                w_curr = jnp.pad(w_curr, ((0, 0), (0, d_pad - d_out)))
                w_all = jnp.pad(w_all, ((0, 0), (0, d_pad - d_out)))
                b_curr = jnp.pad(b_curr, ((0, d_pad - d_out),))
        packed.append((w_curr.astype(compute_dtype),
                       w_all.astype(compute_dtype),
                       b_curr.reshape(1, -1).astype(compute_dtype)))
    return packed, out_dims


def deepsets_forward(x, packed_params, out_dims, activation="relu",
                     sets_per_block=8):
    """DeepSets forward over a batch of same-size sets.

    x             : [B, N, D_in]
    packed_params : output of pack_params
    out_dims      : true (un-padded) output feature count
    Returns [B, N, out_dims] in x.dtype.
    """
    B, N, D_in = x.shape
    n_layers = len(packed_params)
    d_out_pad = packed_params[-1][2].shape[1]

    tb = int(max(1, min(sets_per_block, B)))
    b_pad = _round_up(B, tb)
    if b_pad != B:
        x = jnp.pad(x, ((0, b_pad - B), (0, 0), (0, 0)))   # dummy sets, sliced off
    rows = tb * N
    x2 = x.reshape(b_pad * N, D_in)

    inputs = [x2]
    in_specs = [pl.BlockSpec((rows, D_in), lambda i: (i, 0))]
    for (w_curr, w_all, b) in packed_params:
        inputs += [w_curr, w_all, b]
        in_specs += [pl.BlockSpec(w_curr.shape, lambda i: (0, 0)),
                     pl.BlockSpec(w_all.shape, lambda i: (0, 0)),
                     pl.BlockSpec(b.shape, lambda i: (0, 0))]

    kernel = functools.partial(_deepsets_stack_kernel, activation=activation,
                               n_layers=n_layers, sets_per_block=tb, set_size=N)

    # VMEM budget from actual (double-buffered, tile-padded) blocks, with
    # headroom; capped at 64 MiB so it stays within v7x physical VMEM.
    def tile_bytes(shape, dtype):
        s = (1, 1) + tuple(shape)
        lead = 1
        for d in s[:-2]:
            lead *= d
        return (lead * _round_up(s[-2], 8) * _round_up(s[-1], 128)
                * jnp.dtype(dtype).itemsize)

    vmem_bytes = 2 * (tile_bytes((rows, D_in), x.dtype)
                      + tile_bytes((rows, d_out_pad), x.dtype))
    for arrs in packed_params:
        for a in arrs:
            vmem_bytes += 2 * tile_bytes(a.shape, a.dtype)
    vmem_limit = int(min(64 * 1024 * 1024, max(32 * 1024 * 1024, 4 * vmem_bytes)))

    out2 = pl.pallas_call(
        kernel,
        out_shape=jax.ShapeDtypeStruct((b_pad * N, d_out_pad), x.dtype),
        grid=(b_pad // tb,),
        in_specs=in_specs,
        out_specs=pl.BlockSpec((rows, d_out_pad), lambda i: (i, 0)),
        compiler_params=pltpu.CompilerParams(
            dimension_semantics=("parallel",),      # shards over both v7x TCs
            vmem_limit_bytes=vmem_limit),
    )(*inputs)

    out = out2.reshape(b_pad, N, d_out_pad)
    return out[:B, :, :out_dims]


def init_deepsets_params(key, n_layers, in_dims, hidden_dims, out_dims,
                         dtype=jnp.float32):
    """PyTorch nn.Linear-style U(-1/sqrt(fan_in), 1/sqrt(fan_in)) init.

    Mirrors the PyTorch module's construction exactly: n_layers-1 layers ending
    at hidden_dims, then a final (hidden_dims -> out_dims) layer (so, like the
    PyTorch code, n_layers == 1 requires in_dims == hidden_dims).
    Returns a list of (w_curr [D_in, D_out], b_curr [D_out], w_all [D_in, D_out]).
    """
    dims = []
    d = in_dims
    for _ in range(n_layers - 1):
        dims.append((d, hidden_dims))
        d = hidden_dims
    dims.append((hidden_dims, out_dims))

    params = []
    for (din, dout) in dims:
        key, k1, k2, k3 = jax.random.split(key, 4)
        bound = 1.0 / float(din) ** 0.5
        w_curr = jax.random.uniform(k1, (din, dout), dtype, -bound, bound)
        b_curr = jax.random.uniform(k2, (dout,), dtype, -bound, bound)
        w_all = jax.random.uniform(k3, (din, dout), dtype, -bound, bound)
        params.append((w_curr, b_curr, w_all))
    return params


def deepsets_reference(x, raw_params, activation="relu", compute_dtype=None):
    """Pure-JAX reference of the PyTorch forward (sum BEFORE the fc_all matmul),
    batched over sets: x is [B, N, D_in].  With compute_dtype=bfloat16 it also
    mirrors the kernel's mixed-precision policy (bf16 operands, f32 accum)."""
    cdtype = x.dtype if compute_dtype is None else compute_dtype
    h = x.astype(cdtype)
    for (w_curr, b_curr, w_all) in raw_params:
        wc = w_curr.astype(cdtype)
        wa = w_all.astype(cdtype)
        z_curr = jnp.einsum("bnd,df->bnf", h, wc,
                            preferred_element_type=jnp.float32)
        pooled = jnp.sum(h.astype(jnp.float32), axis=1).astype(cdtype)   # [B, D_in]
        z_all = jnp.dot(pooled, wa, preferred_element_type=jnp.float32)  # [B, D_out]
        z_all = z_all.astype(cdtype).astype(jnp.float32)  # mirror kernel's scatter cast
        z = z_curr + z_all[:, None, :] + b_curr.astype(cdtype).astype(jnp.float32)
        if activation == "relu":
            z = jnp.maximum(z, 0.0)
        elif activation == "tanh":
            z = jnp.tanh(z)
        h = z.astype(cdtype)
    return h.astype(jnp.float32)


if __name__ == "__main__":
    # 64 sets of N=8 elements, in=16, hidden=32, out=8, 3 layers, relu (default).
    n_layers, in_dims, hidden_dims, out_dims = 3, 16, 32, 8
    B, N = 64, 8

    key = jax.random.PRNGKey(0)
    key, kx = jax.random.split(key)
    x = jax.random.normal(kx, (B, N, in_dims), dtype=jnp.float32)

    raw_params = init_deepsets_params(key, n_layers, in_dims, hidden_dims, out_dims)

    # --- f32 path: correctness check against the PyTorch-order reference.
    packed_f32, d_out = pack_params(raw_params, compute_dtype=jnp.float32)
    out_f32 = deepsets_forward(x, packed_f32, d_out, activation="relu",
                               sets_per_block=8)
    out_f32 = jax.block_until_ready(out_f32)
    ref_f32 = deepsets_reference(x, raw_params, activation="relu")
    assert out_f32.shape == (B, N, out_dims), out_f32.shape
    # Small slack for MXU f32-emulation / summation-order differences.
    assert jnp.allclose(out_f32.astype(jnp.float32), ref_f32,
                        atol=2e-3, rtol=2e-3), "f32 mismatch vs reference"

    # --- bf16 path (recommended: native MXU dtype, half the DMA bytes); the
    # reference mirrors the kernel's bf16-operand / f32-accumulation policy.
    packed_bf16, d_out = pack_params(raw_params, compute_dtype=jnp.bfloat16)
    out_bf16 = deepsets_forward(x.astype(jnp.bfloat16), packed_bf16, d_out,
                                activation="relu", sets_per_block=8)
    out_bf16 = jax.block_until_ready(out_bf16)
    ref_bf16 = deepsets_reference(x, raw_params, activation="relu",
                                  compute_dtype=jnp.bfloat16)
    assert out_bf16.shape == (B, N, out_dims), out_bf16.shape
    assert jnp.allclose(out_bf16.astype(jnp.float32), ref_bf16,
                        atol=5e-2, rtol=5e-2), "bf16 mismatch vs reference"

    print("KERNEL_OK")
</pallas_src>

<mosaic_0001>
module attributes {stable_mosaic.version = 11 : i64} {
  func.func @_deepsets_stack_kernel(%arg0: i32, %arg1: memref<64x16xf32, #tpu.memory_space<vmem>>, %arg2: memref<16x32xf32, #tpu.memory_space<vmem>>, %arg3: memref<16x32xf32, #tpu.memory_space<vmem>>, %arg4: memref<1x32xf32, #tpu.memory_space<vmem>>, %arg5: memref<32x32xf32, #tpu.memory_space<vmem>>, %arg6: memref<32x32xf32, #tpu.memory_space<vmem>>, %arg7: memref<1x32xf32, #tpu.memory_space<vmem>>, %arg8: memref<32x128xf32, #tpu.memory_space<vmem>>, %arg9: memref<32x128xf32, #tpu.memory_space<vmem>>, %arg10: memref<1x128xf32, #tpu.memory_space<vmem>>, %arg11: memref<64x128xf32, #tpu.memory_space<vmem>>) attributes {dimension_semantics = [#tpu.dimension_semantics<parallel>], iteration_bounds = array<i64: 8>, scalar_prefetch = 0 : i64, scratch_operands = 0 : i64, tpu.core_type = #tpu.core_type<tc>, window_params = [{transform_indices = @transform_0, window_bounds = array<i64: 64, 16>}, {pipeline_mode = #tpu.pipeline_mode<synchronous>, transform_indices = @transform_1, window_bounds = array<i64: 16, 32>}, {pipeline_mode = #tpu.pipeline_mode<synchronous>, transform_indices = @transform_2, window_bounds = array<i64: 16, 32>}, {pipeline_mode = #tpu.pipeline_mode<synchronous>, transform_indices = @transform_3, window_bounds = array<i64: 1, 32>}, {pipeline_mode = #tpu.pipeline_mode<synchronous>, transform_indices = @transform_4, window_bounds = array<i64: 32, 32>}, {pipeline_mode = #tpu.pipeline_mode<synchronous>, transform_indices = @transform_5, window_bounds = array<i64: 32, 32>}, {pipeline_mode = #tpu.pipeline_mode<synchronous>, transform_indices = @transform_6, window_bounds = array<i64: 1, 32>}, {pipeline_mode = #tpu.pipeline_mode<synchronous>, transform_indices = @transform_7, window_bounds = array<i64: 32, 128>}, {pipeline_mode = #tpu.pipeline_mode<synchronous>, transform_indices = @transform_8, window_bounds = array<i64: 32, 128>}, {pipeline_mode = #tpu.pipeline_mode<synchronous>, transform_indices = @transform_9, window_bounds = array<i64: 1, 128>}, {transform_indices = @transform_10, window_bounds = array<i64: 64, 128>}]} {
    %0 = tpu.iota {dimensions = array<i32: 1>} : vector<8x64xi32>
    %1 = tpu.iota {dimensions = array<i32: 0>} : vector<8x64xi32>
    %c8_i32 = arith.constant 8 : i32
    %2 = vector.broadcast %c8_i32 : i32 to vector<8x64xi32>
    %3 = arith.muli %1, %2 : vector<8x64xi32>
    %4 = arith.cmpi sge, %0, %3 : vector<8x64xi32>
    %c8_i32_0 = arith.constant 8 : i32
    %5 = vector.broadcast %c8_i32_0 : i32 to vector<8x64xi32>
    %6 = arith.addi %3, %5 : vector<8x64xi32>
    %7 = arith.cmpi slt, %0, %6 : vector<8x64xi32>
    %8 = arith.andi %4, %7 : vector<8x64xi1>
    %cst = arith.constant 1.000000e+00 : f32
    %cst_1 = arith.constant 0.000000e+00 : f32
    %9 = vector.broadcast %cst : f32 to vector<8x64xf32>
    %10 = vector.broadcast %cst_1 : f32 to vector<8x64xf32>
    %11 = arith.select %8, %9, %10 : vector<8x64xi1>, vector<8x64xf32>
    %12 = tpu.iota {dimensions = array<i32: 0>} : vector<64x8xi32>
    %13 = tpu.iota {dimensions = array<i32: 1>} : vector<64x8xi32>
    %c8_i32_2 = arith.constant 8 : i32
    %14 = vector.broadcast %c8_i32_2 : i32 to vector<64x8xi32>
    %15 = arith.muli %13, %14 : vector<64x8xi32>
    %16 = arith.cmpi sge, %12, %15 : vector<64x8xi32>
    %c8_i32_3 = arith.constant 8 : i32
    %17 = vector.broadcast %c8_i32_3 : i32 to vector<64x8xi32>
    %18 = arith.addi %15, %17 : vector<64x8xi32>
    %19 = arith.cmpi slt, %12, %18 : vector<64x8xi32>
    %20 = arith.andi %16, %19 : vector<64x8xi1>
    %cst_4 = arith.constant 1.000000e+00 : f32
    %cst_5 = arith.constant 0.000000e+00 : f32
    %21 = vector.broadcast %cst_4 : f32 to vector<64x8xf32>
    %22 = vector.broadcast %cst_5 : f32 to vector<64x8xf32>
    %23 = arith.select %20, %21, %22 : vector<64x8xi1>, vector<64x8xf32>
    %c0 = arith.constant 0 : index
    %c0_6 = arith.constant 0 : index
    %24 = vector.load %arg1[%c0, %c0_6] : memref<64x16xf32, #tpu.memory_space<vmem>>, vector<64x16xf32>
    %c0_7 = arith.constant 0 : index
    %c0_8 = arith.constant 0 : index
    %25 = vector.load %arg2[%c0_7, %c0_8] : memref<16x32xf32, #tpu.memory_space<vmem>>, vector<16x32xf32>
    %c0_9 = arith.constant 0 : index
    %c0_10 = arith.constant 0 : index
    %26 = vector.load %arg3[%c0_9, %c0_10] : memref<16x32xf32, #tpu.memory_space<vmem>>, vector<16x32xf32>
    %c0_11 = arith.constant 0 : index
    %c0_12 = arith.constant 0 : index
    %27 = vector.load %arg4[%c0_11, %c0_12] : memref<1x32xf32, #tpu.memory_space<vmem>>, vector<1x32xf32>
    %cst_13 = arith.constant dense<0.000000e+00> : vector<64x32xf32>
    %28 = tpu.matmul %24, %25, %cst_13 {dimension_numbers = #tpu.dot_dimension_numbers<[1], [0], [0], [1], [0, 0, 1, 1], [], []>} : vector<64x16xf32>, vector<16x32xf32>, vector<64x32xf32> -> vector<64x32xf32>
    %cst_14 = arith.constant dense<0.000000e+00> : vector<8x16xf32>
    %29 = tpu.matmul %11, %24, %cst_14 {dimension_numbers = #tpu.dot_dimension_numbers<[1], [0], [0], [1], [0, 0, 1, 1], [], []>} : vector<8x64xf32>, vector<64x16xf32>, vector<8x16xf32> -> vector<8x16xf32>
    %cst_15 = arith.constant dense<0.000000e+00> : vector<8x32xf32>
    %30 = tpu.matmul %29, %26, %cst_15 {dimension_numbers = #tpu.dot_dimension_numbers<[1], [0], [0], [1], [0, 0, 1, 1], [], []>} : vector<8x16xf32>, vector<16x32xf32>, vector<8x32xf32> -> vector<8x32xf32>
    %cst_16 = arith.constant dense<0.000000e+00> : vector<64x32xf32>
    %31 = tpu.matmul %23, %30, %cst_16 {dimension_numbers = #tpu.dot_dimension_numbers<[1], [0], [0], [1], [0, 0, 1, 1], [], []>} : vector<64x8xf32>, vector<8x32xf32>, vector<64x32xf32> -> vector<64x32xf32>
    %32 = arith.addf %28, %31 : vector<64x32xf32>
    %33 = vector.broadcast %27 : vector<1x32xf32> to vector<64x32xf32>
    %34 = arith.addf %32, %33 : vector<64x32xf32>
    %cst_17 = arith.constant 0.000000e+00 : f32
    %35 = vector.broadcast %cst_17 : f32 to vector<64x32xf32>
    %36 = arith.maximumf %34, %35 : vector<64x32xf32>
    %c0_18 = arith.constant 0 : index
    %c0_19 = arith.constant 0 : index
    %37 = vector.load %arg5[%c0_18, %c0_19] : memref<32x32xf32, #tpu.memory_space<vmem>>, vector<32x32xf32>
    %c0_20 = arith.constant 0 : index
    %c0_21 = arith.constant 0 : index
    %38 = vector.load %arg6[%c0_20, %c0_21] : memref<32x32xf32, #tpu.memory_space<vmem>>, vector<32x32xf32>
    %c0_22 = arith.constant 0 : index
    %c0_23 = arith.constant 0 : index
    %39 = vector.load %arg7[%c0_22, %c0_23] : memref<1x32xf32, #tpu.memory_space<vmem>>, vector<1x32xf32>
    %cst_24 = arith.constant dense<0.000000e+00> : vector<64x32xf32>
    %40 = tpu.matmul %36, %37, %cst_24 {dimension_numbers = #tpu.dot_dimension_numbers<[1], [0], [0], [1], [0, 0, 1, 1], [], []>} : vector<64x32xf32>, vector<32x32xf32>, vector<64x32xf32> -> vector<64x32xf32>
    %cst_25 = arith.constant dense<0.000000e+00> : vector<8x32xf32>
    %41 = tpu.matmul %11, %36, %cst_25 {dimension_numbers = #tpu.dot_dimension_numbers<[1], [0], [0], [1], [0, 0, 1, 1], [], []>} : vector<8x64xf32>, vector<64x32xf32>, vector<8x32xf32> -> vector<8x32xf32>
    %cst_26 = arith.constant dense<0.000000e+00> : vector<8x32xf32>
    %42 = tpu.matmul %41, %38, %cst_26 {dimension_numbers = #tpu.dot_dimension_numbers<[1], [0], [0], [1], [0, 0, 1, 1], [], []>} : vector<8x32xf32>, vector<32x32xf32>, vector<8x32xf32> -> vector<8x32xf32>
    %cst_27 = arith.constant dense<0.000000e+00> : vector<64x32xf32>
    %43 = tpu.matmul %23, %42, %cst_27 {dimension_numbers = #tpu.dot_dimension_numbers<[1], [0], [0], [1], [0, 0, 1, 1], [], []>} : vector<64x8xf32>, vector<8x32xf32>, vector<64x32xf32> -> vector<64x32xf32>
    %44 = arith.addf %40, %43 : vector<64x32xf32>
    %45 = vector.broadcast %39 : vector<1x32xf32> to vector<64x32xf32>
    %46 = arith.addf %44, %45 : vector<64x32xf32>
    %cst_28 = arith.constant 0.000000e+00 : f32
    %47 = vector.broadcast %cst_28 : f32 to vector<64x32xf32>
    %48 = arith.maximumf %46, %47 : vector<64x32xf32>
    %c0_29 = arith.constant 0 : index
    %c0_30 = arith.constant 0 : index
    %49 = vector.load %arg8[%c0_29, %c0_30] : memref<32x128xf32, #tpu.memory_space<vmem>>, vector<32x128xf32>
    %c0_31 = arith.constant 0 : index
    %c0_32 = arith.constant 0 : index
    %50 = vector.load %arg9[%c0_31, %c0_32] : memref<32x128xf32, #tpu.memory_space<vmem>>, vector<32x128xf32>
    %c0_33 = arith.constant 0 : index
    %c0_34 = arith.constant 0 : index
    %51 = vector.load %arg10[%c0_33, %c0_34] : memref<1x128xf32, #tpu.memory_space<vmem>>, vector<1x128xf32>
    %cst_35 = arith.constant dense<0.000000e+00> : vector<64x128xf32>
    %52 = tpu.matmul %48, %49, %cst_35 {dimension_numbers = #tpu.dot_dimension_numbers<[1], [0], [0], [1], [0, 0, 1, 1], [], []>} : vector<64x32xf32>, vector<32x128xf32>, vector<64x128xf32> -> vector<64x128xf32>
    %cst_36 = arith.constant dense<0.000000e+00> : vector<8x32xf32>
    %53 = tpu.matmul %11, %48, %cst_36 {dimension_numbers = #tpu.dot_dimension_numbers<[1], [0], [0], [1], [0, 0, 1, 1], [], []>} : vector<8x64xf32>, vector<64x32xf32>, vector<8x32xf32> -> vector<8x32xf32>
    %cst_37 = arith.constant dense<0.000000e+00> : vector<8x128xf32>
    %54 = tpu.matmul %53, %50, %cst_37 {dimension_numbers = #tpu.dot_dimension_numbers<[1], [0], [0], [1], [0, 0, 1, 1], [], []>} : vector<8x32xf32>, vector<32x128xf32>, vector<8x128xf32> -> vector<8x128xf32>
    %cst_38 = arith.constant dense<0.000000e+00> : vector<64x128xf32>
    %55 = tpu.matmul %23, %54, %cst_38 {dimension_numbers = #tpu.dot_dimension_numbers<[1], [0], [0], [1], [0, 0, 1, 1], [], []>} : vector<64x8xf32>, vector<8x128xf32>, vector<64x128xf32> -> vector<64x128xf32>
    %56 = arith.addf %52, %55 : vector<64x128xf32>
    %57 = vector.broadcast %51 : vector<1x128xf32> to vector<64x128xf32>
    %58 = arith.addf %56, %57 : vector<64x128xf32>
    %cst_39 = arith.constant 0.000000e+00 : f32
    %59 = vector.broadcast %cst_39 : f32 to vector<64x128xf32>
    %60 = arith.maximumf %58, %59 : vector<64x128xf32>
    %c0_40 = arith.constant 0 : index
    %c0_41 = arith.constant 0 : index
    %61 = vector.load %arg11[%c0_40, %c0_41] : memref<64x128xf32, #tpu.memory_space<vmem>>, vector<64x128xf32>
    tpu.vector_store %arg11[%c0_40, %c0_41], %60 {strides = array<i32>} : memref<64x128xf32, #tpu.memory_space<vmem>>, vector<64x128xf32>,
    return
  }
  func.func @transform_0(%arg0: i32) -> (i32, i32) {
    %c0_i32 = arith.constant 0 : i32
    %c0_i32_0 = arith.constant 0 : i32
    return %arg0, %c0_i32 : i32, i32
  }
  func.func @transform_1(%arg0: i32) -> (i32, i32) {
    %c0_i32 = arith.constant 0 : i32
    %c0_i32_0 = arith.constant 0 : i32
    %c0_i32_1 = arith.constant 0 : i32
    return %c0_i32, %c0_i32_0 : i32, i32
  }
  func.func @transform_2(%arg0: i32) -> (i32, i32) {
    %c0_i32 = arith.constant 0 : i32
    %c0_i32_0 = arith.constant 0 : i32
    %c0_i32_1 = arith.constant 0 : i32
    return %c0_i32, %c0_i32_0 : i32, i32
  }
  func.func @transform_3(%arg0: i32) -> (i32, i32) {
    %c0_i32 = arith.constant 0 : i32
    %c0_i32_0 = arith.constant 0 : i32
    %c0_i32_1 = arith.constant 0 : i32
    return %c0_i32, %c0_i32_0 : i32, i32
  }
  func.func @transform_4(%arg0: i32) -> (i32, i32) {
    %c0_i32 = arith.constant 0 : i32
    %c0_i32_0 = arith.constant 0 : i32
    %c0_i32_1 = arith.constant 0 : i32
    return %c0_i32, %c0_i32_0 : i32, i32
  }
  func.func @transform_5(%arg0: i32) -> (i32, i32) {
    %c0_i32 = arith.constant 0 : i32
    %c0_i32_0 = arith.constant 0 : i32
    %c0_i32_1 = arith.constant 0 : i32
    return %c0_i32, %c0_i32_0 : i32, i32
  }
  func.func @transform_6(%arg0: i32) -> (i32, i32) {
    %c0_i32 = arith.constant 0 : i32
    %c0_i32_0 = arith.constant 0 : i32
    %c0_i32_1 = arith.constant 0 : i32
    return %c0_i32, %c0_i32_0 : i32, i32
  }
  func.func @transform_7(%arg0: i32) -> (i32, i32) {
    %c0_i32 = arith.constant 0 : i32
    %c0_i32_0 = arith.constant 0 : i32
    %c0_i32_1 = arith.constant 0 : i32
    return %c0_i32, %c0_i32_0 : i32, i32
  }
  func.func @transform_8(%arg0: i32) -> (i32, i32) {
    %c0_i32 = arith.constant 0 : i32
    %c0_i32_0 = arith.constant 0 : i32
    %c0_i32_1 = arith.constant 0 : i32
    return %c0_i32, %c0_i32_0 : i32, i32
  }
  func.func @transform_9(%arg0: i32) -> (i32, i32) {
    %c0_i32 = arith.constant 0 : i32
    %c0_i32_0 = arith.constant 0 : i32
    %c0_i32_1 = arith.constant 0 : i32
    return %c0_i32, %c0_i32_0 : i32, i32
  }
  func.func @transform_10(%arg0: i32) -> (i32, i32) {
    %c0_i32 = arith.constant 0 : i32
    %c0_i32_0 = arith.constant 0 : i32
    return %arg0, %c0_i32 : i32, i32
  }
}

</mosaic_0001>

<llo_original>
// kernel: tpu_custom_call.1
$region0: #{tpu_custom_call.1}
  #allocation0 [shape = 'u32[]', space=smem, size = 0x4, offset = 0x4, fixed_abs, tag = 'smem constant byte address 0x4 - core index']
  #allocation1 [shape = 'u32[144,128]{1,0:T(1,128)}', space=vmem, size = 0x12000, scoped, tag = 'internal scratch']
  %s0 = inlined_call_operand.vmem [shape: f32[512,16], index: 0, kind: input, shape index: {}]
  %s1 = inlined_call_operand.vmem [shape: f32[16,32], index: 1, kind: input, shape index: {}]
  %s2 = inlined_call_operand.vmem [shape: f32[16,32], index: 2, kind: input, shape index: {}]
  %s3 = inlined_call_operand.vmem [shape: f32[1,32], index: 3, kind: input, shape index: {}]
  %s4 = inlined_call_operand.vmem [shape: f32[32,32], index: 4, kind: input, shape index: {}]
  %s5 = inlined_call_operand.vmem [shape: f32[32,32], index: 5, kind: input, shape index: {}]
  %s6 = inlined_call_operand.vmem [shape: f32[1,32], index: 6, kind: input, shape index: {}]
  %s7 = inlined_call_operand.vmem [shape: f32[32,128], index: 7, kind: input, shape index: {}]
  %s8 = inlined_call_operand.vmem [shape: f32[32,128], index: 8, kind: input, shape index: {}]
  %s9 = inlined_call_operand.vmem [shape: f32[1,128], index: 9, kind: input, shape index: {}]
  %s10 = inlined_call_operand.hbm [shape: f32[512,128], index: 10, kind: output, shape index: {}]
  %s11 = sld [smem:[#allocation0]]
  $region73: #{tpu_custom_call.1} parent=0
    _
  %s13 = ssub.s32 1, %s11
  %s14 = scalar_select 0, %s13, %s11
  $region1: #{tpu_custom_call.1} parent=0
    #allocation2 [shape = 'u8[65536]{0}', space=vmem, size = 0x10000, scoped, tag = 'output window, operand 0']
    #allocation3 [shape = 's32[2]{0}', space=sflag, size = 0x8, scoped, tag = 'scoped memory for tpu_custom_call.1']
    %15 = vsyncpa [#allocation3], 0
    %s16 = scalar_lea.sflag [#allocation3], 1
    %17 = vsyncpa %s16, 0
    loop: start=0, step=1, limit=10
    $region2: #{tpu_custom_call.1} parent=1 // loop_pre_header
      _
    $region3: #{tpu_custom_call.1} parent=1 // loop_header
      %s19 = sphi 0, %s23
      %p20 = scmp.ge.s32.totalorder %s19, 10
      %s29 = sphi 0, %s31
      %s32 = sphi 0, %s29
      %s33 = sphi 0, %s32
      %s49 = sphi 0, %s33
      %s53 = sphi 0, %s53
      %s55 = sphi 0, %s53
      %s56 = sphi 0, %s55
      %s70 = sphi 0, %s56
      %s74 = sphi 0, %s74
      %s76 = sphi 0, %s74
      %s77 = sphi 0, %s76
      %s91 = sphi 0, %s77
      %s95 = sphi 0, %s95
      %s97 = sphi 0, %s95
      %s98 = sphi 0, %s97
      %s112 = sphi 0, %s98
      %s116 = sphi 0, %s116
      %s118 = sphi 0, %s116
      %s119 = sphi 0, %s118
      %s133 = sphi 0, %s119
      %s137 = sphi 0, %s137
      %s139 = sphi 0, %s137
      %s140 = sphi 0, %s139
      %s154 = sphi 0, %s140
      %s158 = sphi 0, %s158
      %s160 = sphi 0, %s158
      %s161 = sphi 0, %s160
      %s175 = sphi 0, %s161
      %s179 = sphi 0, %s179
      %s181 = sphi 0, %s179
      %s182 = sphi 0, %s181
      %s196 = sphi 0, %s182
      %s200 = sphi 0, %s200
      %s202 = sphi 0, %s200
      %s203 = sphi 0, %s202
      %s217 = sphi 0, %s203
      %s221 = sphi 0, %s221
      %s223 = sphi 0, %s221
      %s224 = sphi 0, %s223
      %s238 = sphi 0, %s224
      %s244 = sphi 0, %s246
      %s247 = sphi 0, %s244
      %s248 = sphi 0, %s247
      %s264 = sphi 0, %s248
    $region4: #{tpu_custom_call.1} parent=1 // loop_header_branch
      %22 = sbr.rel (%p20) target = $region8
    $region5: #{tpu_custom_call.1} parent=1 // loop_body
      %s24 = ssub.s32 %s19, 1
      %s25 = ssub.s32 %s19, 2
      %s26 = sadd.s32 %s19, 1
      %s27 = ssub.s32 %s19, %s26
      %p28 = scmp.eq.s32.totalorder %s27, 0
      %s30 = sadd.s32 %s29, 1
      %s31 = scalar_select %p28, %s29, %s30
      %p34 = pneg %p28
      %p35 = scmp.eq.s32.totalorder %s19, 7
      %p36 = por %p34, %p35
      %p37 = scmp.ne.s32.totalorder %s29, %s32
      %p38 = scmp.eq.s32.totalorder %s19, 0
      %p39 = por %p37, %p38
      %p40 = scmp.ne.s32.totalorder %s29, %s32
      %p41 = scmp.eq.s32.totalorder %s24, 7
      %p42 = por %p40, %p41
      %p43 = scmp.ne.s32.totalorder %s32, %s33
      %p44 = scmp.eq.s32.totalorder %s24, 0
      %p45 = por %p43, %p44
      %p46 = scmp.ne.s32.totalorder %s32, %s33
      %p47 = scmp.eq.s32.totalorder %s25, 7
      %p48 = por %p46, %p47
      %p50 = scmp.ne.s32.totalorder %s33, %s49
      %p51 = scmp.eq.s32.totalorder %s25, 0
      %p52 = por %p50, %p51
      %s54 = sadd.s32 %s53, 1
      %p57 = scmp.eq.s32.totalorder %s19, 7
      %p58 = scmp.ne.s32.totalorder %s53, %s55
      %p59 = scmp.eq.s32.totalorder %s19, 0
      %p60 = por %p58, %p59
      %p61 = scmp.ne.s32.totalorder %s53, %s55
      %p62 = scmp.eq.s32.totalorder %s24, 7
      %p63 = por %p61, %p62
      %p64 = scmp.ne.s32.totalorder %s55, %s56
      %p65 = scmp.eq.s32.totalorder %s24, 0
      %p66 = por %p64, %p65
      %p67 = scmp.ne.s32.totalorder %s55, %s56
      %p68 = scmp.eq.s32.totalorder %s25, 7
      %p69 = por %p67, %p68
      %p71 = scmp.ne.s32.totalorder %s56, %s70
      %p72 = scmp.eq.s32.totalorder %s25, 0
      %p73 = por %p71, %p72
      %s75 = sadd.s32 %s74, 1
      %p78 = scmp.eq.s32.totalorder %s19, 7
      %p79 = scmp.ne.s32.totalorder %s74, %s76
      %p80 = scmp.eq.s32.totalorder %s19, 0
      %p81 = por %p79, %p80
      %p82 = scmp.ne.s32.totalorder %s74, %s76
      %p83 = scmp.eq.s32.totalorder %s24, 7
      %p84 = por %p82, %p83
      %p85 = scmp.ne.s32.totalorder %s76, %s77
      %p86 = scmp.eq.s32.totalorder %s24, 0
      %p87 = por %p85, %p86
      %p88 = scmp.ne.s32.totalorder %s76, %s77
      %p89 = scmp.eq.s32.totalorder %s25, 7
      %p90 = por %p88, %p89
      %p92 = scmp.ne.s32.totalorder %s77, %s91
      %p93 = scmp.eq.s32.totalorder %s25, 0
      %p94 = por %p92, %p93
      %s96 = sadd.s32 %s95, 1
      %p99 = scmp.eq.s32.totalorder %s19, 7
      %p100 = scmp.ne.s32.totalorder %s95, %s97
      %p101 = scmp.eq.s32.totalorder %s19, 0
      %p102 = por %p100, %p101
      %p103 = scmp.ne.s32.totalorder %s95, %s97
      %p104 = scmp.eq.s32.totalorder %s24, 7
      %p105 = por %p103, %p104
      %p106 = scmp.ne.s32.totalorder %s97, %s98
      %p107 = scmp.eq.s32.totalorder %s24, 0
      %p108 = por %p106, %p107
      %p109 = scmp.ne.s32.totalorder %s97, %s98
      %p110 = scmp.eq.s32.totalorder %s25, 7
      %p111 = por %p109, %p110
      %p113 = scmp.ne.s32.totalorder %s98, %s112
      %p114 = scmp.eq.s32.totalorder %s25, 0
      %p115 = por %p113, %p114
      %s117 = sadd.s32 %s116, 1
      %p120 = scmp.eq.s32.totalorder %s19, 7
      %p121 = scmp.ne.s32.totalorder %s116, %s118
      %p122 = scmp.eq.s32.totalorder %s19, 0
      %p123 = por %p121, %p122
      %p124 = scmp.ne.s32.totalorder %s116, %s118
      %p125 = scmp.eq.s32.totalorder %s24, 7
      %p126 = por %p124, %p125
      %p127 = scmp.ne.s32.totalorder %s118, %s119
      %p128 = scmp.eq.s32.totalorder %s24, 0
      %p129 = por %p127, %p128
      %p130 = scmp.ne.s32.totalorder %s118, %s119
      %p131 = scmp.eq.s32.totalorder %s25, 7
      %p132 = por %p130, %p131
      %p134 = scmp.ne.s32.totalorder %s119, %s133
      %p135 = scmp.eq.s32.totalorder %s25, 0
      %p136 = por %p134, %p135
      %s138 = sadd.s32 %s137, 1
      %p141 = scmp.eq.s32.totalorder %s19, 7
      %p142 = scmp.ne.s32.totalorder %s137, %s139
      %p143 = scmp.eq.s32.totalorder %s19, 0
      %p144 = por %p142, %p143
      %p145 = scmp.ne.s32.totalorder %s137, %s139
      %p146 = scmp.eq.s32.totalorder %s24, 7
      %p147 = por %p145, %p146
      %p148 = scmp.ne.s32.totalorder %s139, %s140
      %p149 = scmp.eq.s32.totalorder %s24, 0
      %p150 = por %p148, %p149
      %p151 = scmp.ne.s32.totalorder %s139, %s140
      %p152 = scmp.eq.s32.totalorder %s25, 7
      %p153 = por %p151, %p152
      %p155 = scmp.ne.s32.totalorder %s140, %s154
      %p156 = scmp.eq.s32.totalorder %s25, 0
      %p157 = por %p155, %p156
      %s159 = sadd.s32 %s158, 1
      %p162 = scmp.eq.s32.totalorder %s19, 7
      %p163 = scmp.ne.s32.totalorder %s158, %s160
      %p164 = scmp.eq.s32.totalorder %s19, 0
      %p165 = por %p163, %p164
      %p166 = scmp.ne.s32.totalorder %s158, %s160
      %p167 = scmp.eq.s32.totalorder %s24, 7
      %p168 = por %p166, %p167
      %p169 = scmp.ne.s32.totalorder %s160, %s161
      %p170 = scmp.eq.s32.totalorder %s24, 0
      %p171 = por %p169, %p170
      %p172 = scmp.ne.s32.totalorder %s160, %s161
      %p173 = scmp.eq.s32.totalorder %s25, 7
      %p174 = por %p172, %p173
      %p176 = scmp.ne.s32.totalorder %s161, %s175
      %p177 = scmp.eq.s32.totalorder %s25, 0
      %p178 = por %p176, %p177
      %s180 = sadd.s32 %s179, 1
      %p183 = scmp.eq.s32.totalorder %s19, 7
      %p184 = scmp.ne.s32.totalorder %s179, %s181
      %p185 = scmp.eq.s32.totalorder %s19, 0
      %p186 = por %p184, %p185
      %p187 = scmp.ne.s32.totalorder %s179, %s181
      %p188 = scmp.eq.s32.totalorder %s24, 7
      %p189 = por %p187, %p188
      %p190 = scmp.ne.s32.totalorder %s181, %s182
      %p191 = scmp.eq.s32.totalorder %s24, 0
      %p192 = por %p190, %p191
      %p193 = scmp.ne.s32.totalorder %s181, %s182
      %p194 = scmp.eq.s32.totalorder %s25, 7
      %p195 = por %p193, %p194
      %p197 = scmp.ne.s32.totalorder %s182, %s196
      %p198 = scmp.eq.s32.totalorder %s25, 0
      %p199 = por %p197, %p198
      %s201 = sadd.s32 %s200, 1
      %p204 = scmp.eq.s32.totalorder %s19, 7
      %p205 = scmp.ne.s32.totalorder %s200, %s202
      %p206 = scmp.eq.s32.totalorder %s19, 0
      %p207 = por %p205, %p206
      %p208 = scmp.ne.s32.totalorder %s200, %s202
      %p209 = scmp.eq.s32.totalorder %s24, 7
      %p210 = por %p208, %p209
      %p211 = scmp.ne.s32.totalorder %s202, %s203
      %p212 = scmp.eq.s32.totalorder %s24, 0
      %p213 = por %p211, %p212
      %p214 = scmp.ne.s32.totalorder %s202, %s203
      %p215 = scmp.eq.s32.totalorder %s25, 7
      %p216 = por %p214, %p215
      %p218 = scmp.ne.s32.totalorder %s203, %s217
      %p219 = scmp.eq.s32.totalorder %s25, 0
      %p220 = por %p218, %p219
      %s222 = sadd.s32 %s221, 1
      %p225 = scmp.eq.s32.totalorder %s19, 7
      %p226 = scmp.ne.s32.totalorder %s221, %s223
      %p227 = scmp.eq.s32.totalorder %s19, 0
      %p228 = por %p226, %p227
      %p229 = scmp.ne.s32.totalorder %s221, %s223
      %p230 = scmp.eq.s32.totalorder %s24, 7
      %p231 = por %p229, %p230
      %p232 = scmp.ne.s32.totalorder %s223, %s224
      %p233 = scmp.eq.s32.totalorder %s24, 0
      %p234 = por %p232, %p233
      %p235 = scmp.ne.s32.totalorder %s223, %s224
      %p236 = scmp.eq.s32.totalorder %s25, 7
      %p237 = por %p235, %p236
      %p239 = scmp.ne.s32.totalorder %s224, %s238
      %p240 = scmp.eq.s32.totalorder %s25, 0
      %p241 = por %p239, %p240
      %s242 = ssub.s32 %s19, %s26
      %p243 = scmp.eq.s32.totalorder %s242, 0
      %s245 = sadd.s32 %s244, 1
      %s246 = scalar_select %p243, %s244, %s245
      %p249 = pneg %p243
      %p250 = scmp.eq.s32.totalorder %s19, 7
      %p251 = por %p249, %p250
      %p252 = scmp.ne.s32.totalorder %s244, %s247
      %p253 = scmp.eq.s32.totalorder %s19, 0
      %p254 = por %p252, %p253
      %p255 = scmp.ne.s32.totalorder %s244, %s247
      %p256 = scmp.eq.s32.totalorder %s24, 7
      %p257 = por %p255, %p256
      %p258 = scmp.ne.s32.totalorder %s247, %s248
      %p259 = scmp.eq.s32.totalorder %s24, 0
      %p260 = por %p258, %p259
      %p261 = scmp.ne.s32.totalorder %s247, %s248
      %p262 = scmp.eq.s32.totalorder %s25, 7
      %p263 = por %p261, %p262
      %p265 = scmp.ne.s32.totalorder %s248, %s264
      %p266 = scmp.eq.s32.totalorder %s25, 0
      %p267 = por %p265, %p266
      %p268 = scmp.le.s32.totalorder 1, %s19
      %p269 = scmp.lt.s32.totalorder %s19, 9
      %p270 = pnand %p268, %p269
      %p271 = pneg %p270
      // Predicated region
      $region9: #{tpu_custom_call.1} parent=5 // pred_check
        _
      $region10: #{tpu_custom_call.1} parent=5 // pred_check_branch
        %273 = sbr.rel (%p270) target = $region12
      $region11: #{tpu_custom_call.1} parent=5 // pred_region
        %s274 = ssub.s32 %s19, 1
        // Predicated region
        $region13: #{tpu_custom_call.1} parent=11 // pred_check
          %p275 = pneg %p66
        $region14: #{tpu_custom_call.1} parent=11 // pred_check_branch
          %277 = sbr.rel (%p275) target = $region16
        $region15: #{tpu_custom_call.1} parent=11 // pred_region
          _
        $region16: #{tpu_custom_call.1} parent=11 // pred_fallthru
          _
        // Predicated region
        $region17: #{tpu_custom_call.1} parent=11 // pred_check
          %p278 = pneg %p87
        $region18: #{tpu_custom_call.1} parent=11 // pred_check_branch
          %280 = sbr.rel (%p278) target = $region20
        $region19: #{tpu_custom_call.1} parent=11 // pred_region
          _
        $region20: #{tpu_custom_call.1} parent=11 // pred_fallthru
          _
        // Predicated region
        $region21: #{tpu_custom_call.1} parent=11 // pred_check
          %p281 = pneg %p108
        $region22: #{tpu_custom_call.1} parent=11 // pred_check_branch
          %283 = sbr.rel (%p281) target = $region24
        $region23: #{tpu_custom_call.1} parent=11 // pred_region
          _
        $region24: #{tpu_custom_call.1} parent=11 // pred_fallthru
          _
        // Predicated region
        $region25: #{tpu_custom_call.1} parent=11 // pred_check
          %p284 = pneg %p129
        $region26: #{tpu_custom_call.1} parent=11 // pred_check_branch
          %286 = sbr.rel (%p284) target = $region28
        $region27: #{tpu_custom_call.1} parent=11 // pred_region
          _
        $region28: #{tpu_custom_call.1} parent=11 // pred_fallthru
          _
        // Predicated region
        $region29: #{tpu_custom_call.1} parent=11 // pred_check
          %p287 = pneg %p150
        $region30: #{tpu_custom_call.1} parent=11 // pred_check_branch
          %289 = sbr.rel (%p287) target = $region32
        $region31: #{tpu_custom_call.1} parent=11 // pred_region
          _
        $region32: #{tpu_custom_call.1} parent=11 // pred_fallthru
          _
        // Predicated region
        $region33: #{tpu_custom_call.1} parent=11 // pred_check
          %p290 = pneg %p171
        $region34: #{tpu_custom_call.1} parent=11 // pred_check_branch
          %292 = sbr.rel (%p290) target = $region36
        $region35: #{tpu_custom_call.1} parent=11 // pred_region
          _
        $region36: #{tpu_custom_call.1} parent=11 // pred_fallthru
          _
        // Predicated region
        $region37: #{tpu_custom_call.1} parent=11 // pred_check
          %p293 = pneg %p192
        $region38: #{tpu_custom_call.1} parent=11 // pred_check_branch
          %295 = sbr.rel (%p293) target = $region40
        $region39: #{tpu_custom_call.1} parent=11 // pred_region
          _
        $region40: #{tpu_custom_call.1} parent=11 // pred_fallthru
          _
        // Predicated region
        $region41: #{tpu_custom_call.1} parent=11 // pred_check
          %p296 = pneg %p213
        $region42: #{tpu_custom_call.1} parent=11 // pred_check_branch
          %298 = sbr.rel (%p296) target = $region44
        $region43: #{tpu_custom_call.1} parent=11 // pred_region
          _
        $region44: #{tpu_custom_call.1} parent=11 // pred_fallthru
          _
        // Predicated region
        $region45: #{tpu_custom_call.1} parent=11 // pred_check
          %p299 = pneg %p234
        $region46: #{tpu_custom_call.1} parent=11 // pred_check_branch
          %301 = sbr.rel (%p299) target = $region48
        $region47: #{tpu_custom_call.1} parent=11 // pred_region
          _
        $region48: #{tpu_custom_call.1} parent=11 // pred_fallthru
          _
      $region12: #{tpu_custom_call.1} parent=5 // pred_fallthru
        _
      %p302 = scmp.lt.s32.totalorder %s19, 8
      // Predicated region
      $region49: #{tpu_custom_call.1} parent=5 // pred_check
        %p303 = pneg %p302
      $region50: #{tpu_custom_call.1} parent=5 // pred_check_branch
        %305 = sbr.rel (%p303) target = $region52
      $region51: #{tpu_custom_call.1} parent=5 // pred_region
        // Predicated region
        $region53: #{tpu_custom_call.1} parent=51 // pred_check
          %p306 = pneg %p39
        $region54: #{tpu_custom_call.1} parent=51 // pred_check_branch
          %308 = sbr.rel (%p306) target = $region56
        $region55: #{tpu_custom_call.1} parent=51 // pred_region
          %s309 = smul.u32 8, %s19
          %p310 = scmp.lt.s32.totalorder %s309, 63
          %s311 = scalar_select %p310, %s309, 63
          %s312 = smul.addr %s311, 8
          %s313 = scalar_lea.vmem %s0, %s312
          %s314 = smul.u32 8, %s19
        $region56: #{tpu_custom_call.1} parent=51 // pred_fallthru
          _
      $region52: #{tpu_custom_call.1} parent=5 // pred_fallthru
        _
      %p315 = scmp.le.s32.totalorder 1, %s19
      %p316 = scmp.lt.s32.totalorder %s19, 9
      %p317 = pnand %p315, %p316
      %p318 = pneg %p317
      // Predicated region
      $region57: #{tpu_custom_call.1} parent=5 // pred_check
        _
      $region58: #{tpu_custom_call.1} parent=5 // pred_check_branch
        %320 = sbr.rel (%p317) target = $region60
      $region59: #{tpu_custom_call.1} parent=5 // pred_region
        %s321 = ssub.s32 %s19, 1
        %s322 = smul.u32 8, %s24
        %p323 = scmp.lt.s32.totalorder %s322, 63
        %s324 = scalar_select %p323, %s322, 63
        %s325 = smul.addr %s324, 8
        %s326 = scalar_lea.vmem %s0, %s325
        %p327 = pneg %p45
        %p328 = pneg %p42
        %p329 = pneg %p66
        %p330 = pneg %p63
        %p331 = pneg %p87
        %p332 = pneg %p84
        %p333 = pneg %p108
        %p334 = pneg %p105
        %p335 = pneg %p129
        %p336 = pneg %p126
        %p337 = pneg %p150
        %p338 = pneg %p147
        %p339 = pneg %p171
        %p340 = pneg %p168
        %p341 = pneg %p192
        %p342 = pneg %p189
        %p343 = pneg %p213
        %p344 = pneg %p210
        %p345 = pneg %p234
        %p346 = pneg %p231
        %p347 = pneg %p260
        %p348 = pneg %p257
        %s349 = sand.u32 %s247, 1
        %s350 = scalar_lea.sflag [#allocation3], %s349
        %s351 = sand.u32 %s247, 1
        %s352 = smul.addr %s351, 64
        %s353 = scalar_lea.vmem [#allocation2], %s352
        %s354 = smul.u32 8, %s24
        %p355 = scmp.lt.s32.totalorder %s354, 63
        %s356 = scalar_select %p355, %s354, 63
        %s357 = smul.addr %s356, 8
        %s358 = scalar_lea.vmem %s0, %s357
        %s359 = smul.u32 8, %s24
        %s360 = smul.u32 8, %s24
        %v361 = vlaneseq
        %v362 = vand.u32 %v361, 127
        %v363 = vlaneseq
        %v364 = vshrl.u32 %v363, 7
        %v365 = vmul.u32 %v364, 8
        %vm366 = vcmp.ge.s32.totalorder %v362, %v365
        %v367 = vadd.s32 %v365, 8
        %vm368 = vcmp.lt.s32.totalorder %v362, %v367
        %vm369 = vmand %vm366, %vm368
        %v370 = vsel %vm369, 1.0, 0.0
        %v371 = vadd.s32 %v364, 8
        %v372 = vadd.s32 %v364, 16
        %v373 = vadd.s32 %v364, 24
        %v374 = vadd.s32 %v364, 32
        %v375 = vadd.s32 %v364, 40
        %v376 = vadd.s32 %v364, 48
        %v377 = vadd.s32 %v364, 56
        %v378 = vmul.u32 %v362, 8
        %vm379 = vcmp.ge.s32.totalorder %v364, %v378
        %vm380 = vcmp.ge.s32.totalorder %v371, %v378
        %vm381 = vcmp.ge.s32.totalorder %v372, %v378
        %vm382 = vcmp.ge.s32.totalorder %v373, %v378
        %vm383 = vcmp.ge.s32.totalorder %v374, %v378
        %vm384 = vcmp.ge.s32.totalorder %v375, %v378
        %vm385 = vcmp.ge.s32.totalorder %v376, %v378
        %vm386 = vcmp.ge.s32.totalorder %v377, %v378
        %v387 = vadd.s32 %v378, 8
        %vm388 = vcmp.lt.s32.totalorder %v364, %v387
        %vm389 = vcmp.lt.s32.totalorder %v371, %v387
        %vm390 = vcmp.lt.s32.totalorder %v372, %v387
        %vm391 = vcmp.lt.s32.totalorder %v373, %v387
        %vm392 = vcmp.lt.s32.totalorder %v374, %v387
        %vm393 = vcmp.lt.s32.totalorder %v375, %v387
        %vm394 = vcmp.lt.s32.totalorder %v376, %v387
        %vm395 = vcmp.lt.s32.totalorder %v377, %v387
        %vm396 = vmand %vm379, %vm388
        %vm397 = vmand %vm380, %vm389
        %vm398 = vmand %vm381, %vm390
        %vm399 = vmand %vm382, %vm391
        %vm400 = vmand %vm383, %vm392
        %vm401 = vmand %vm384, %vm393
        %vm402 = vmand %vm385, %vm394
        %vm403 = vmand %vm386, %vm395
        %v404 = vsel %vm396, 1.0, 0.0
        %v405 = vsel %vm397, 1.0, 0.0
        %v406 = vsel %vm398, 1.0, 0.0
        %v407 = vsel %vm399, 1.0, 0.0
        %v408 = vsel %vm400, 1.0, 0.0
        %v409 = vsel %vm401, 1.0, 0.0
        %v410 = vsel %vm402, 1.0, 0.0
        %v411 = vsel %vm403, 1.0, 0.0
        %v412 = vld [vmem:[%s358] sm:$0xff]
        %v413 = vld [vmem:[%s358 + $0x8] sm:$0xff]
        %v414 = vld [vmem:[%s358 + $0x10] sm:$0xff]
        %v415 = vld [vmem:[%s358 + $0x18] sm:$0xff]
        %v416 = vld [vmem:[%s358 + $0x20] sm:$0xff]
        %v417 = vld [vmem:[%s358 + $0x28] sm:$0xff]
        %v418 = vld [vmem:[%s358 + $0x30] sm:$0xff]
        %v419 = vld [vmem:[%s358 + $0x38] sm:$0xff]
        %v420 = vld [vmem:[%s1] sm:$0xff]
        %v421 = vld [vmem:[%s1 + $0x8] sm:$0xff]
        %v422 = vld [vmem:[%s2] sm:$0xff]
        %v423 = vld [vmem:[%s2 + $0x8] sm:$0xff]
        %v424 = vld [vmem:[%s3] sm:$0x1]
        %vm425 = vcmask 523264
        %v427 = vsel %vm425, %v370, 0
        %429 = vmatprep.subr.mxu0 0.0
        %430 = vmatpush1.msra.mxu0 %v412
        %431 = vmatprep.subr.mxu0 0.0
        %432 = vmatpush1.msra.mxu0 %v413
        %433 = vmatprep.subr.mxu0 0.0
        %434 = vmatpush1.msra.mxu0 %v414
        %435 = vmatprep.subr.mxu0 0.0
        %436 = vmatpush1.msra.mxu0 %v415
        %437 = vmatprep.subr.mxu0 0.0
        %438 = vmatpush1.msra.mxu0 %v416
        %439 = vmatprep.subr.mxu0 0.0
        %440 = vmatpush1.msra.mxu0 %v417
        %441 = vmatprep.subr.mxu0 0.0
        %442 = vmatpush1.msra.mxu0 %v418
        %443 = vmatprep.subr.mxu0 0.0
        %444 = vmatpush1.msra.mxu0 %v419
        %445 = vmatprep.subr.mxu0 0.0
        %446 = vmatpush1.msra.mxu0 0.0
        %447 = vmatprep.subr.mxu0 0.0
        %448 = vmatpush1.msra.mxu0 0.0
        %449 = vmatprep.subr.mxu0 0.0
        %450 = vmatpush1.msra.mxu0 0.0
        %451 = vmatprep.subr.mxu0 0.0
        %452 = vmatpush1.msra.mxu0 0.0
        %453 = vmatprep.subr.mxu0 0.0
        %454 = vmatpush1.msra.mxu0 0.0
        %455 = vmatprep.subr.mxu0 0.0
        %456 = vmatpush1.msra.mxu0 0.0
        %457 = vmatprep.subr.mxu0 0.0
        %458 = vmatpush1.msra.mxu0 0.0
        %459 = vmatprep.subr.mxu0 0.0
        %460 = vmatpush1.msra.mxu0 0.0
        %461 = vmatprep.subr.mxu0 0.0
        %462 = vmatpush1.msra.mxu0 0.0
        %463 = vmatprep.subr.mxu0 0.0
        %464 = vmatpush1.msra.mxu0 0.0
        %465 = vmatprep.subr.mxu0 0.0
        %466 = vmatpush1.msra.mxu0 0.0
        %467 = vmatprep.subr.mxu0 0.0
        %468 = vmatpush1.msra.mxu0 0.0
        %469 = vmatprep.subr.mxu0 0.0
        %470 = vmatpush1.msra.mxu0 0.0
        %471 = vmatprep.subr.mxu0 0.0
        %472 = vmatpush1.msra.mxu0 0.0
        %473 = vmatprep.subr.mxu0 0.0
        %474 = vmatpush1.msra.mxu0 0.0
        %475 = vmatprep.subr.mxu0 0.0
        %476 = vmatpush1.msra.mxu0 0.0
        %477 = vmatprep.subr.mxu0 0.0
        %478 = vmatpush1.msra.mxu0 0.0
        %479 = vmatprep.subr.mxu0 0.0
        %480 = vmatpush1.msra.mxu0 0.0
        %481 = vmatprep.subr.mxu0 0.0
        %482 = vmatpush1.msra.mxu0 0.0
        %483 = vmatprep.subr.mxu0 0.0
        %484 = vmatpush1.msra.mxu0 0.0
        %485 = vmatprep.subr.mxu0 0.0
        %486 = vmatpush1.msra.mxu0 0.0
        %487 = vmatprep.subr.mxu0 0.0
        %488 = vmatpush1.msra.mxu0 0.0
        %489 = vmatprep.subr.mxu0 0.0
        %490 = vmatpush1.msra.mxu0 0.0
        %491 = vmatprep.subr.mxu0 0.0
        %492 = vmatpush1.msra.mxu0 0.0
        %493 = vmatprep.mubr.f32.mxu0 0.0
        %494 = vmatmul.mubr.f32.gmra.mrb[0].mxu0 %v427
        %v495 = vpop.f32.mrb[0].mxu0
        %v496 = vadd.f32 0.0, %v495
        %v497 = vpop.f32.mrb[0].mxu0
        %498 = vdwg.mxu0
        %vm499 = vcmask 130048
        %v501 = vsel %vm499, %v496, 0
        %503 = vmatprep.subr.mxu0 0.0
        %504 = vmatpush1.msra.mxu0 %v422
        %505 = vmatprep.subr.mxu0 0.0
        %506 = vmatpush1.msra.mxu0 %v423
        %507 = vmatprep.subr.mxu0 0.0
        %508 = vmatpush1.msra.mxu0 0.0
        %509 = vmatprep.subr.mxu0 0.0
        %510 = vmatpush1.msra.mxu0 0.0
        %511 = vmatprep.subr.mxu0 0.0
        %512 = vmatpush1.msra.mxu0 0.0
        %513 = vmatprep.subr.mxu0 0.0
        %514 = vmatpush1.msra.mxu0 0.0
        %515 = vmatprep.subr.mxu0 0.0
        %516 = vmatpush1.msra.mxu0 0.0
        %517 = vmatprep.subr.mxu0 0.0
        %518 = vmatpush1.msra.mxu0 0.0
        %519 = vmatprep.subr.mxu0 0.0
        %520 = vmatpush1.msra.mxu0 0.0
        %521 = vmatprep.subr.mxu0 0.0
        %522 = vmatpush1.msra.mxu0 0.0
        %523 = vmatprep.subr.mxu0 0.0
        %524 = vmatpush1.msra.mxu0 0.0
        %525 = vmatprep.subr.mxu0 0.0
        %526 = vmatpush1.msra.mxu0 0.0
        %527 = vmatprep.subr.mxu0 0.0
        %528 = vmatpush1.msra.mxu0 0.0
        %529 = vmatprep.subr.mxu0 0.0
        %530 = vmatpush1.msra.mxu0 0.0
        %531 = vmatprep.subr.mxu0 0.0
        %532 = vmatpush1.msra.mxu0 0.0
        %533 = vmatprep.subr.mxu0 0.0
        %534 = vmatpush1.msra.mxu0 0.0
        %535 = vmatprep.subr.mxu0 0.0
        %536 = vmatpush1.msra.mxu0 0.0
        %537 = vmatprep.subr.mxu0 0.0
        %538 = vmatpush1.msra.mxu0 0.0
        %539 = vmatprep.subr.mxu0 0.0
        %540 = vmatpush1.msra.mxu0 0.0
        %541 = vmatprep.subr.mxu0 0.0
        %542 = vmatpush1.msra.mxu0 0.0
        %543 = vmatprep.subr.mxu0 0.0
        %544 = vmatpush1.msra.mxu0 0.0
        %545 = vmatprep.subr.mxu0 0.0
        %546 = vmatpush1.msra.mxu0 0.0
        %547 = vmatprep.subr.mxu0 0.0
        %548 = vmatpush1.msra.mxu0 0.0
        %549 = vmatprep.subr.mxu0 0.0
        %550 = vmatpush1.msra.mxu0 0.0
        %551 = vmatprep.subr.mxu0 0.0
        %552 = vmatpush1.msra.mxu0 0.0
        %553 = vmatprep.subr.mxu0 0.0
        %554 = vmatpush1.msra.mxu0 0.0
        %555 = vmatprep.subr.mxu0 0.0
        %556 = vmatpush1.msra.mxu0 0.0
        %557 = vmatprep.subr.mxu0 0.0
        %558 = vmatpush1.msra.mxu0 0.0
        %559 = vmatprep.subr.mxu0 0.0
        %560 = vmatpush1.msra.mxu0 0.0
        %561 = vmatprep.subr.mxu0 0.0
        %562 = vmatpush1.msra.mxu0 0.0
        %563 = vmatprep.subr.mxu0 0.0
        %564 = vmatpush1.msra.mxu0 0.0
        %565 = vmatprep.subr.mxu0 0.0
        %566 = vmatpush1.msra.mxu0 0.0
        %567 = vmatprep.mubr.f32.mxu0 0.0
        %568 = vmatmul.mubr.f32.gmra.mrb[0].mxu0 %v501
        %v569 = vpop.f32.mrb[0].mxu0
        %v570 = vadd.f32 0.0, %v569
        %v571 = vpop.f32.mrb[0].mxu0
        %572 = vdwg.mxu0
        %vm573 = vcmask 64512
        %v575 = vsel %vm573, %v404, 0
        %v578 = vsel %vm573, %v405, 0
        %v581 = vsel %vm573, %v406, 0
        %v584 = vsel %vm573, %v407, 0
        %v587 = vsel %vm573, %v408, 0
        %v590 = vsel %vm573, %v409, 0
        %v593 = vsel %vm573, %v410, 0
        %v596 = vsel %vm573, %v411, 0
        %598 = vmatprep.subr.mxu0 0.0
        %599 = vmatpush1.msra.mxu0 %v570
        %600 = vmatprep.subr.mxu0 0.0
        %601 = vmatpush1.msra.mxu0 0.0
        %602 = vmatprep.subr.mxu0 0.0
        %603 = vmatpush1.msra.mxu0 0.0
        %604 = vmatprep.subr.mxu0 0.0
        %605 = vmatpush1.msra.mxu0 0.0
        %606 = vmatprep.subr.mxu0 0.0
        %607 = vmatpush1.msra.mxu0 0.0
        %608 = vmatprep.subr.mxu0 0.0
        %609 = vmatpush1.msra.mxu0 0.0
        %610 = vmatprep.subr.mxu0 0.0
        %611 = vmatpush1.msra.mxu0 0.0
        %612 = vmatprep.subr.mxu0 0.0
        %613 = vmatpush1.msra.mxu0 0.0
        %614 = vmatprep.subr.mxu0 0.0
        %615 = vmatpush1.msra.mxu0 0.0
        %616 = vmatprep.subr.mxu0 0.0
        %617 = vmatpush1.msra.mxu0 0.0
        %618 = vmatprep.subr.mxu0 0.0
        %619 = vmatpush1.msra.mxu0 0.0
        %620 = vmatprep.subr.mxu0 0.0
        %621 = vmatpush1.msra.mxu0 0.0
        %622 = vmatprep.subr.mxu0 0.0
        %623 = vmatpush1.msra.mxu0 0.0
        %624 = vmatprep.subr.mxu0 0.0
        %625 = vmatpush1.msra.mxu0 0.0
        %626 = vmatprep.subr.mxu0 0.0
        %627 = vmatpush1.msra.mxu0 0.0
        %628 = vmatprep.subr.mxu0 0.0
        %629 = vmatpush1.msra.mxu0 0.0
        %630 = vmatprep.subr.mxu0 0.0
        %631 = vmatpush1.msra.mxu0 0.0
        %632 = vmatprep.subr.mxu0 0.0
        %633 = vmatpush1.msra.mxu0 0.0
        %634 = vmatprep.subr.mxu0 0.0
        %635 = vmatpush1.msra.mxu0 0.0
        %636 = vmatprep.subr.mxu0 0.0
        %637 = vmatpush1.msra.mxu0 0.0
        %638 = vmatprep.subr.mxu0 0.0
        %639 = vmatpush1.msra.mxu0 0.0
        %640 = vmatprep.subr.mxu0 0.0
        %641 = vmatpush1.msra.mxu0 0.0
        %642 = vmatprep.subr.mxu0 0.0
        %643 = vmatpush1.msra.mxu0 0.0
        %644 = vmatprep.subr.mxu0 0.0
        %645 = vmatpush1.msra.mxu0 0.0
        %646 = vmatprep.subr.mxu0 0.0
        %647 = vmatpush1.msra.mxu0 0.0
        %648 = vmatprep.subr.mxu0 0.0
        %649 = vmatpush1.msra.mxu0 0.0
        %650 = vmatprep.subr.mxu0 0.0
        %651 = vmatpush1.msra.mxu0 0.0
        %652 = vmatprep.subr.mxu0 0.0
        %653 = vmatpush1.msra.mxu0 0.0
        %654 = vmatprep.subr.mxu0 0.0
        %655 = vmatpush1.msra.mxu0 0.0
        %656 = vmatprep.subr.mxu0 0.0
        %657 = vmatpush1.msra.mxu0 0.0
        %658 = vmatprep.subr.mxu0 0.0
        %659 = vmatpush1.msra.mxu0 0.0
        %660 = vmatprep.subr.mxu0 0.0
        %661 = vmatpush1.msra.mxu0 0.0
        %662 = vmatprep.mubr.f32.mxu0 0.0
        %663 = vmatmul.mubr.f32.gmra.mrb[0].mxu0 %v575
        %v664 = vpop.f32.mrb[0].mxu0
        %v665 = vadd.f32 0.0, %v664
        %v666 = vpop.f32.mrb[0].mxu0
        %667 = vmatprep.mubr.f32.mxu0 0.0
        %668 = vmatmul.mubr.f32.gmra.mrb[0].mxu0 %v578
        %v669 = vpop.f32.mrb[0].mxu0
        %v670 = vadd.f32 0.0, %v669
        %v671 = vpop.f32.mrb[0].mxu0
        %672 = vmatprep.mubr.f32.mxu0 0.0
        %673 = vmatmul.mubr.f32.gmra.mrb[0].mxu0 %v581
        %v674 = vpop.f32.mrb[0].mxu0
        %v675 = vadd.f32 0.0, %v674
        %v676 = vpop.f32.mrb[0].mxu0
        %677 = vmatprep.mubr.f32.mxu0 0.0
        %678 = vmatmul.mubr.f32.gmra.mrb[0].mxu0 %v584
        %v679 = vpop.f32.mrb[0].mxu0
        %v680 = vadd.f32 0.0, %v679
        %v681 = vpop.f32.mrb[0].mxu0
        %682 = vmatprep.mubr.f32.mxu0 0.0
        %683 = vmatmul.mubr.f32.gmra.mrb[0].mxu0 %v587
        %v684 = vpop.f32.mrb[0].mxu0
        %v685 = vadd.f32 0.0, %v684
        %v686 = vpop.f32.mrb[0].mxu0
        %687 = vmatprep.mubr.f32.mxu0 0.0
        %688 = vmatmul.mubr.f32.gmra.mrb[0].mxu0 %v590
        %v689 = vpop.f32.mrb[0].mxu0
        %v690 = vadd.f32 0.0, %v689
        %v691 = vpop.f32.mrb[0].mxu0
        %692 = vmatprep.mubr.f32.mxu0 0.0
        %693 = vmatmul.mubr.f32.gmra.mrb[0].mxu0 %v593
        %v694 = vpop.f32.mrb[0].mxu0
        %v695 = vadd.f32 0.0, %v694
        %v696 = vpop.f32.mrb[0].mxu0
        %697 = vmatprep.mubr.f32.mxu0 0.0
        %698 = vmatmul.mubr.f32.gmra.mrb[0].mxu0 %v596
        %v699 = vpop.f32.mrb[0].mxu0
        %v700 = vadd.f32 0.0, %v699
        %v701 = vpop.f32.mrb[0].mxu0
        %702 = vdwg.mxu0
        %v704 = vsel %vm499, %v412, 0
        %v707 = vsel %vm499, %v413, 0
        %v710 = vsel %vm499, %v414, 0
        %v713 = vsel %vm499, %v415, 0
        %v716 = vsel %vm499, %v416, 0
        %v719 = vsel %vm499, %v417, 0
        %v722 = vsel %vm499, %v418, 0
        %v725 = vsel %vm499, %v419, 0
        %727 = vmatprep.subr.mxu0 0.0
        %728 = vmatpush1.msra.mxu0 %v420
        %729 = vmatprep.subr.mxu0 0.0
        %730 = vmatpush1.msra.mxu0 %v421
        %731 = vmatprep.subr.mxu0 0.0
        %732 = vmatpush1.msra.mxu0 0.0
        %733 = vmatprep.subr.mxu0 0.0
        %734 = vmatpush1.msra.mxu0 0.0
        %735 = vmatprep.subr.mxu0 0.0
        %736 = vmatpush1.msra.mxu0 0.0
        %737 = vmatprep.subr.mxu0 0.0
        %738 = vmatpush1.msra.mxu0 0.0
        %739 = vmatprep.subr.mxu0 0.0
        %740 = vmatpush1.msra.mxu0 0.0
        %741 = vmatprep.subr.mxu0 0.0
        %742 = vmatpush1.msra.mxu0 0.0
        %743 = vmatprep.subr.mxu0 0.0
        %744 = vmatpush1.msra.mxu0 0.0
        %745 = vmatprep.subr.mxu0 0.0
        %746 = vmatpush1.msra.mxu0 0.0
        %747 = vmatprep.subr.mxu0 0.0
        %748 = vmatpush1.msra.mxu0 0.0
        %749 = vmatprep.subr.mxu0 0.0
        %750 = vmatpush1.msra.mxu0 0.0
        %751 = vmatprep.subr.mxu0 0.0
        %752 = vmatpush1.msra.mxu0 0.0
        %753 = vmatprep.subr.mxu0 0.0
        %754 = vmatpush1.msra.mxu0 0.0
        %755 = vmatprep.subr.mxu0 0.0
        %756 = vmatpush1.msra.mxu0 0.0
        %757 = vmatprep.subr.mxu0 0.0
        %758 = vmatpush1.msra.mxu0 0.0
        %759 = vmatprep.subr.mxu0 0.0
        %760 = vmatpush1.msra.mxu0 0.0
        %761 = vmatprep.subr.mxu0 0.0
        %762 = vmatpush1.msra.mxu0 0.0
        %763 = vmatprep.subr.mxu0 0.0
        %764 = vmatpush1.msra.mxu0 0.0
        %765 = vmatprep.subr.mxu0 0.0
        %766 = vmatpush1.msra.mxu0 0.0
        %767 = vmatprep.subr.mxu0 0.0
        %768 = vmatpush1.msra.mxu0 0.0
        %769 = vmatprep.subr.mxu0 0.0
        %770 = vmatpush1.msra.mxu0 0.0
        %771 = vmatprep.subr.mxu0 0.0
        %772 = vmatpush1.msra.mxu0 0.0
        %773 = vmatprep.subr.mxu0 0.0
        %774 = vmatpush1.msra.mxu0 0.0
        %775 = vmatprep.subr.mxu0 0.0
        %776 = vmatpush1.msra.mxu0 0.0
        %777 = vmatprep.subr.mxu0 0.0
        %778 = vmatpush1.msra.mxu0 0.0
        %779 = vmatprep.subr.mxu0 0.0
        %780 = vmatpush1.msra.mxu0 0.0
        %781 = vmatprep.subr.mxu0 0.0
        %782 = vmatpush1.msra.mxu0 0.0
        %783 = vmatprep.subr.mxu0 0.0
        %784 = vmatpush1.msra.mxu0 0.0
        %785 = vmatprep.subr.mxu0 0.0
        %786 = vmatpush1.msra.mxu0 0.0
        %787 = vmatprep.subr.mxu0 0.0
        %788 = vmatpush1.msra.mxu0 0.0
        %789 = vmatprep.subr.mxu0 0.0
        %790 = vmatpush1.msra.mxu0 0.0
        %791 = vmatprep.mubr.f32.mxu0 0.0
        %792 = vmatmul.mubr.f32.gmra.mrb[0].mxu0 %v704
        %v793 = vpop.f32.mrb[0].mxu0
        %v794 = vadd.f32 %v665, %v793
        %v795 = vpop.f32.mrb[0].mxu0
        %796 = vmatprep.mubr.f32.mxu0 0.0
        %797 = vmatmul.mubr.f32.gmra.mrb[0].mxu0 %v707
        %v798 = vpop.f32.mrb[0].mxu0
        %v799 = vadd.f32 %v670, %v798
        %v800 = vpop.f32.mrb[0].mxu0
        %801 = vmatprep.mubr.f32.mxu0 0.0
        %802 = vmatmul.mubr.f32.gmra.mrb[0].mxu0 %v710
        %v803 = vpop.f32.mrb[0].mxu0
        %v804 = vadd.f32 %v675, %v803
        %v805 = vpop.f32.mrb[0].mxu0
        %806 = vmatprep.mubr.f32.mxu0 0.0
        %807 = vmatmul.mubr.f32.gmra.mrb[0].mxu0 %v713
        %v808 = vpop.f32.mrb[0].mxu0
        %v809 = vadd.f32 %v680, %v808
        %v810 = vpop.f32.mrb[0].mxu0
        %811 = vmatprep.mubr.f32.mxu0 0.0
        %812 = vmatmul.mubr.f32.gmra.mrb[0].mxu0 %v716
        %v813 = vpop.f32.mrb[0].mxu0
        %v814 = vadd.f32 %v685, %v813
        %v815 = vpop.f32.mrb[0].mxu0
        %816 = vmatprep.mubr.f32.mxu0 0.0
        %817 = vmatmul.mubr.f32.gmra.mrb[0].mxu0 %v719
        %v818 = vpop.f32.mrb[0].mxu0
        %v819 = vadd.f32 %v690, %v818
        %v820 = vpop.f32.mrb[0].mxu0
        %821 = vmatprep.mubr.f32.mxu0 0.0
        %822 = vmatmul.mubr.f32.gmra.mrb[0].mxu0 %v722
        %v823 = vpop.f32.mrb[0].mxu0
        %v824 = vadd.f32 %v695, %v823
        %v825 = vpop.f32.mrb[0].mxu0
        %826 = vmatprep.mubr.f32.mxu0 0.0
        %827 = vmatmul.mubr.f32.gmra.mrb[0].mxu0 %v725
        %v828 = vpop.f32.mrb[0].mxu0
        %v829 = vadd.f32 %v700, %v828
        %v830 = vpop.f32.mrb[0].mxu0
        %831 = vdwg.mxu0
        %v833 = vlaneseq
        %v834 = vshrl.u32 %v833, 7
        %v835 = vsub.s32 0, %v834
        %v836 = vrot.slane %v424, %v835
        %v838 = vadd.f32 %v794, %v836
        %v839 = vadd.f32 %v799, %v836
        %v840 = vadd.f32 %v804, %v836
        %v841 = vadd.f32 %v809, %v836
        %v842 = vadd.f32 %v814, %v836
        %v843 = vadd.f32 %v819, %v836
        %v844 = vadd.f32 %v824, %v836
        %v845 = vadd.f32 %v829, %v836
        %v846 = vmax.f32 %v838, 0.0
        %v847 = vmax.f32 %v839, 0.0
        %v848 = vmax.f32 %v840, 0.0
        %v849 = vmax.f32 %v841, 0.0
        %v850 = vmax.f32 %v842, 0.0
        %v851 = vmax.f32 %v843, 0.0
        %v852 = vmax.f32 %v844, 0.0
        %v853 = vmax.f32 %v845, 0.0
        %v854 = vld [vmem:[%s4] sm:$0xff]
        %v855 = vld [vmem:[%s4 + $0x8] sm:$0xff]
        %v856 = vld [vmem:[%s4 + $0x10] sm:$0xff]
        %v857 = vld [vmem:[%s4 + $0x18] sm:$0xff]
        %v858 = vld [vmem:[%s5] sm:$0xff]
        %v859 = vld [vmem:[%s5 + $0x8] sm:$0xff]
        %v860 = vld [vmem:[%s5 + $0x10] sm:$0xff]
        %v861 = vld [vmem:[%s5 + $0x18] sm:$0xff]
        %v862 = vld [vmem:[%s6] sm:$0x1]
        %863 = vmatprep.subr.mxu0 0.0
        %864 = vmatpush1.msra.mxu0 %v846
        %865 = vmatprep.subr.mxu0 0.0
        %866 = vmatpush1.msra.mxu0 %v847
        %867 = vmatprep.subr.mxu0 0.0
        %868 = vmatpush1.msra.mxu0 %v848
        %869 = vmatprep.subr.mxu0 0.0
        %870 = vmatpush1.msra.mxu0 %v849
        %871 = vmatprep.subr.mxu0 0.0
        %872 = vmatpush1.msra.mxu0 %v850
        %873 = vmatprep.subr.mxu0 0.0
        %874 = vmatpush1.msra.mxu0 %v851
        %875 = vmatprep.subr.mxu0 0.0
        %876 = vmatpush1.msra.mxu0 %v852
        %877 = vmatprep.subr.mxu0 0.0
        %878 = vmatpush1.msra.mxu0 %v853
        %879 = vmatprep.subr.mxu0 0.0
        %880 = vmatpush1.msra.mxu0 0.0
        %881 = vmatprep.subr.mxu0 0.0
        %882 = vmatpush1.msra.mxu0 0.0
        %883 = vmatprep.subr.mxu0 0.0
        %884 = vmatpush1.msra.mxu0 0.0
        %885 = vmatprep.subr.mxu0 0.0
        %886 = vmatpush1.msra.mxu0 0.0
        %887 = vmatprep.subr.mxu0 0.0
        %888 = vmatpush1.msra.mxu0 0.0
        %889 = vmatprep.subr.mxu0 0.0
        %890 = vmatpush1.msra.mxu0 0.0
        %891 = vmatprep.subr.mxu0 0.0
        %892 = vmatpush1.msra.mxu0 0.0
        %893 = vmatprep.subr.mxu0 0.0
        %894 = vmatpush1.msra.mxu0 0.0
        %895 = vmatprep.subr.mxu0 0.0
        %896 = vmatpush1.msra.mxu0 0.0
        %897 = vmatprep.subr.mxu0 0.0
        %898 = vmatpush1.msra.mxu0 0.0
        %899 = vmatprep.subr.mxu0 0.0
        %900 = vmatpush1.msra.mxu0 0.0
        %901 = vmatprep.subr.mxu0 0.0
        %902 = vmatpush1.msra.mxu0 0.0
        %903 = vmatprep.subr.mxu0 0.0
        %904 = vmatpush1.msra.mxu0 0.0
        %905 = vmatprep.subr.mxu0 0.0
        %906 = vmatpush1.msra.mxu0 0.0
        %907 = vmatprep.subr.mxu0 0.0
        %908 = vmatpush1.msra.mxu0 0.0
        %909 = vmatprep.subr.mxu0 0.0
        %910 = vmatpush1.msra.mxu0 0.0
        %911 = vmatprep.subr.mxu0 0.0
        %912 = vmatpush1.msra.mxu0 0.0
        %913 = vmatprep.subr.mxu0 0.0
        %914 = vmatpush1.msra.mxu0 0.0
        %915 = vmatprep.subr.mxu0 0.0
        %916 = vmatpush1.msra.mxu0 0.0
        %917 = vmatprep.subr.mxu0 0.0
        %918 = vmatpush1.msra.mxu0 0.0
        %919 = vmatprep.subr.mxu0 0.0
        %920 = vmatpush1.msra.mxu0 0.0
        %921 = vmatprep.subr.mxu0 0.0
        %922 = vmatpush1.msra.mxu0 0.0
        %923 = vmatprep.subr.mxu0 0.0
        %924 = vmatpush1.msra.mxu0 0.0
        %925 = vmatprep.subr.mxu0 0.0
        %926 = vmatpush1.msra.mxu0 0.0
        %927 = vmatprep.mubr.f32.mxu0 0.0
        %928 = vmatmul.mubr.f32.gmra.mrb[0].mxu0 %v427
        %v929 = vpop.f32.mrb[0].mxu0
        %v930 = vadd.f32 0.0, %v929
        %v931 = vpop.f32.mrb[0].mxu0
        %932 = vdwg.mxu0
        %vm933 = vcmask 261120
        %v935 = vsel %vm933, %v930, 0
        %937 = vmatprep.subr.mxu0 0.0
        %938 = vmatpush1.msra.mxu0 %v858
        %939 = vmatprep.subr.mxu0 0.0
        %940 = vmatpush1.msra.mxu0 %v859
        %941 = vmatprep.subr.mxu0 0.0
        %942 = vmatpush1.msra.mxu0 %v860
        %943 = vmatprep.subr.mxu0 0.0
        %944 = vmatpush1.msra.mxu0 %v861
        %945 = vmatprep.subr.mxu0 0.0
        %946 = vmatpush1.msra.mxu0 0.0
        %947 = vmatprep.subr.mxu0 0.0
        %948 = vmatpush1.msra.mxu0 0.0
        %949 = vmatprep.subr.mxu0 0.0
        %950 = vmatpush1.msra.mxu0 0.0
        %951 = vmatprep.subr.mxu0 0.0
        %952 = vmatpush1.msra.mxu0 0.0
        %953 = vmatprep.subr.mxu0 0.0
        %954 = vmatpush1.msra.mxu0 0.0
        %955 = vmatprep.subr.mxu0 0.0
        %956 = vmatpush1.msra.mxu0 0.0
        %957 = vmatprep.subr.mxu0 0.0
        %958 = vmatpush1.msra.mxu0 0.0
        %959 = vmatprep.subr.mxu0 0.0
        %960 = vmatpush1.msra.mxu0 0.0
        %961 = vmatprep.subr.mxu0 0.0
        %962 = vmatpush1.msra.mxu0 0.0
        %963 = vmatprep.subr.mxu0 0.0
        %964 = vmatpush1.msra.mxu0 0.0
        %965 = vmatprep.subr.mxu0 0.0
        %966 = vmatpush1.msra.mxu0 0.0
        %967 = vmatprep.subr.mxu0 0.0
        %968 = vmatpush1.msra.mxu0 0.0
        %969 = vmatprep.subr.mxu0 0.0
        %970 = vmatpush1.msra.mxu0 0.0
        %971 = vmatprep.subr.mxu0 0.0
        %972 = vmatpush1.msra.mxu0 0.0
        %973 = vmatprep.subr.mxu0 0.0
        %974 = vmatpush1.msra.mxu0 0.0
        %975 = vmatprep.subr.mxu0 0.0
        %976 = vmatpush1.msra.mxu0 0.0
        %977 = vmatprep.subr.mxu0 0.0
        %978 = vmatpush1.msra.mxu0 0.0
        %979 = vmatprep.subr.mxu0 0.0
        %980 = vmatpush1.msra.mxu0 0.0
        %981 = vmatprep.subr.mxu0 0.0
        %982 = vmatpush1.msra.mxu0 0.0
        %983 = vmatprep.subr.mxu0 0.0
        %984 = vmatpush1.msra.mxu0 0.0
        %985 = vmatprep.subr.mxu0 0.0
        %986 = vmatpush1.msra.mxu0 0.0
        %987 = vmatprep.subr.mxu0 0.0
        %988 = vmatpush1.msra.mxu0 0.0
        %989 = vmatprep.subr.mxu0 0.0
        %990 = vmatpush1.msra.mxu0 0.0
        %991 = vmatprep.subr.mxu0 0.0
        %992 = vmatpush1.msra.mxu0 0.0
        %993 = vmatprep.subr.mxu0 0.0
        %994 = vmatpush1.msra.mxu0 0.0
        %995 = vmatprep.subr.mxu0 0.0
        %996 = vmatpush1.msra.mxu0 0.0
        %997 = vmatprep.subr.mxu0 0.0
        %998 = vmatpush1.msra.mxu0 0.0
        %999 = vmatprep.subr.mxu0 0.0
        %1000 = vmatpush1.msra.mxu0 0.0
        %1001 = vmatprep.mubr.f32.mxu0 0.0
        %1002 = vmatmul.mubr.f32.gmra.mrb[0].mxu0 %v935
        %v1003 = vpop.f32.mrb[0].mxu0
        %v1004 = vadd.f32 0.0, %v1003
        %v1005 = vpop.f32.mrb[0].mxu0
        %1006 = vdwg.mxu0
        %1007 = vmatprep.subr.mxu0 0.0
        %1008 = vmatpush1.msra.mxu0 %v1004
        %1009 = vmatprep.subr.mxu0 0.0
        %1010 = vmatpush1.msra.mxu0 0.0
        %1011 = vmatprep.subr.mxu0 0.0
        %1012 = vmatpush1.msra.mxu0 0.0
        %1013 = vmatprep.subr.mxu0 0.0
        %1014 = vmatpush1.msra.mxu0 0.0
        %1015 = vmatprep.subr.mxu0 0.0
        %1016 = vmatpush1.msra.mxu0 0.0
        %1017 = vmatprep.subr.mxu0 0.0
        %1018 = vmatpush1.msra.mxu0 0.0
        %1019 = vmatprep.subr.mxu0 0.0
        %1020 = vmatpush1.msra.mxu0 0.0
        %1021 = vmatprep.subr.mxu0 0.0
        %1022 = vmatpush1.msra.mxu0 0.0
        %1023 = vmatprep.subr.mxu0 0.0
        %1024 = vmatpush1.msra.mxu0 0.0
        %1025 = vmatprep.subr.mxu0 0.0
        %1026 = vmatpush1.msra.mxu0 0.0
        %1027 = vmatprep.subr.mxu0 0.0
        %1028 = vmatpush1.msra.mxu0 0.0
        %1029 = vmatprep.subr.mxu0 0.0
        %1030 = vmatpush1.msra.mxu0 0.0
        %1031 = vmatprep.subr.mxu0 0.0
        %1032 = vmatpush1.msra.mxu0 0.0
        %1033 = vmatprep.subr.mxu0 0.0
        %1034 = vmatpush1.msra.mxu0 0.0
        %1035 = vmatprep.subr.mxu0 0.0
        %1036 = vmatpush1.msra.mxu0 0.0
        %1037 = vmatprep.subr.mxu0 0.0
        %1038 = vmatpush1.msra.mxu0 0.0
        %1039 = vmatprep.subr.mxu0 0.0
        %1040 = vmatpush1.msra.mxu0 0.0
        %1041 = vmatprep.subr.mxu0 0.0
        %1042 = vmatpush1.msra.mxu0 0.0
        %1043 = vmatprep.subr.mxu0 0.0
        %1044 = vmatpush1.msra.mxu0 0.0
        %1045 = vmatprep.subr.mxu0 0.0
        %1046 = vmatpush1.msra.mxu0 0.0
        %1047 = vmatprep.subr.mxu0 0.0
        %1048 = vmatpush1.msra.mxu0 0.0
        %1049 = vmatprep.subr.mxu0 0.0
        %1050 = vmatpush1.msra.mxu0 0.0
        %1051 = vmatprep.subr.mxu0 0.0
        %1052 = vmatpush1.msra.mxu0 0.0
        %1053 = vmatprep.subr.mxu0 0.0
        %1054 = vmatpush1.msra.mxu0 0.0
        %1055 = vmatprep.subr.mxu0 0.0
        %1056 = vmatpush1.msra.mxu0 0.0
        %1057 = vmatprep.subr.mxu0 0.0
        %1058 = vmatpush1.msra.mxu0 0.0
        %1059 = vmatprep.subr.mxu0 0.0
        %1060 = vmatpush1.msra.mxu0 0.0
        %1061 = vmatprep.subr.mxu0 0.0
        %1062 = vmatpush1.msra.mxu0 0.0
        %1063 = vmatprep.subr.mxu0 0.0
        %1064 = vmatpush1.msra.mxu0 0.0
        %1065 = vmatprep.subr.mxu0 0.0
        %1066 = vmatpush1.msra.mxu0 0.0
        %1067 = vmatprep.subr.mxu0 0.0
        %1068 = vmatpush1.msra.mxu0 0.0
        %1069 = vmatprep.subr.mxu0 0.0
        %1070 = vmatpush1.msra.mxu0 0.0
        %1071 = vmatprep.mubr.f32.mxu0 0.0
        %1072 = vmatmul.mubr.f32.gmra.mrb[0].mxu0 %v575
        %v1073 = vpop.f32.mrb[0].mxu0
        %v1074 = vadd.f32 0.0, %v1073
        %v1075 = vpop.f32.mrb[0].mxu0
        %1076 = vmatprep.mubr.f32.mxu0 0.0
        %1077 = vmatmul.mubr.f32.gmra.mrb[0].mxu0 %v578
        %v1078 = vpop.f32.mrb[0].mxu0
        %v1079 = vadd.f32 0.0, %v1078
        %v1080 = vpop.f32.mrb[0].mxu0
        %1081 = vmatprep.mubr.f32.mxu0 0.0
        %1082 = vmatmul.mubr.f32.gmra.mrb[0].mxu0 %v581
        %v1083 = vpop.f32.mrb[0].mxu0
        %v1084 = vadd.f32 0.0, %v1083
        %v1085 = vpop.f32.mrb[0].mxu0
        %1086 = vmatprep.mubr.f32.mxu0 0.0
        %1087 = vmatmul.mubr.f32.gmra.mrb[0].mxu0 %v584
        %v1088 = vpop.f32.mrb[0].mxu0
        %v1089 = vadd.f32 0.0, %v1088
        %v1090 = vpop.f32.mrb[0].mxu0
        %1091 = vmatprep.mubr.f32.mxu0 0.0
        %1092 = vmatmul.mubr.f32.gmra.mrb[0].mxu0 %v587
        %v1093 = vpop.f32.mrb[0].mxu0
        %v1094 = vadd.f32 0.0, %v1093
        %v1095 = vpop.f32.mrb[0].mxu0
        %1096 = vmatprep.mubr.f32.mxu0 0.0
        %1097 = vmatmul.mubr.f32.gmra.mrb[0].mxu0 %v590
        %v1098 = vpop.f32.mrb[0].mxu0
        %v1099 = vadd.f32 0.0, %v1098
        %v1100 = vpop.f32.mrb[0].mxu0
        %1101 = vmatprep.mubr.f32.mxu0 0.0
        %1102 = vmatmul.mubr.f32.gmra.mrb[0].mxu0 %v593
        %v1103 = vpop.f32.mrb[0].mxu0
        %v1104 = vadd.f32 0.0, %v1103
        %v1105 = vpop.f32.mrb[0].mxu0
        %1106 = vmatprep.mubr.f32.mxu0 0.0
        %1107 = vmatmul.mubr.f32.gmra.mrb[0].mxu0 %v596
        %v1108 = vpop.f32.mrb[0].mxu0
        %v1109 = vadd.f32 0.0, %v1108
        %v1110 = vpop.f32.mrb[0].mxu0
        %1111 = vdwg.mxu0
        %v1113 = vsel %vm933, %v846, 0
        %v1116 = vsel %vm933, %v847, 0
        %v1119 = vsel %vm933, %v848, 0
        %v1122 = vsel %vm933, %v849, 0
        %v1125 = vsel %vm933, %v850, 0
        %v1128 = vsel %vm933, %v851, 0
        %v1131 = vsel %vm933, %v852, 0
        %v1134 = vsel %vm933, %v853, 0
        %1136 = vmatprep.subr.mxu0 0.0
        %1137 = vmatpush1.msra.mxu0 %v854
        %1138 = vmatprep.subr.mxu0 0.0
        %1139 = vmatpush1.msra.mxu0 %v855
        %1140 = vmatprep.subr.mxu0 0.0
        %1141 = vmatpush1.msra.mxu0 %v856
        %1142 = vmatprep.subr.mxu0 0.0
        %1143 = vmatpush1.msra.mxu0 %v857
        %1144 = vmatprep.subr.mxu0 0.0
        %1145 = vmatpush1.msra.mxu0 0.0
        %1146 = vmatprep.subr.mxu0 0.0
        %1147 = vmatpush1.msra.mxu0 0.0
        %1148 = vmatprep.subr.mxu0 0.0
        %1149 = vmatpush1.msra.mxu0 0.0
        %1150 = vmatprep.subr.mxu0 0.0
        %1151 = vmatpush1.msra.mxu0 0.0
        %1152 = vmatprep.subr.mxu0 0.0
        %1153 = vmatpush1.msra.mxu0 0.0
        %1154 = vmatprep.subr.mxu0 0.0
        %1155 = vmatpush1.msra.mxu0 0.0
        %1156 = vmatprep.subr.mxu0 0.0
        %1157 = vmatpush1.msra.mxu0 0.0
        %1158 = vmatprep.subr.mxu0 0.0
        %1159 = vmatpush1.msra.mxu0 0.0
        %1160 = vmatprep.subr.mxu0 0.0
        %1161 = vmatpush1.msra.mxu0 0.0
        %1162 = vmatprep.subr.mxu0 0.0
        %1163 = vmatpush1.msra.mxu0 0.0
        %1164 = vmatprep.subr.mxu0 0.0
        %1165 = vmatpush1.msra.mxu0 0.0
        %1166 = vmatprep.subr.mxu0 0.0
        %1167 = vmatpush1.msra.mxu0 0.0
        %1168 = vmatprep.subr.mxu0 0.0
        %1169 = vmatpush1.msra.mxu0 0.0
        %1170 = vmatprep.subr.mxu0 0.0
        %1171 = vmatpush1.msra.mxu0 0.0
        %1172 = vmatprep.subr.mxu0 0.0
        %1173 = vmatpush1.msra.mxu0 0.0
        %1174 = vmatprep.subr.mxu0 0.0
        %1175 = vmatpush1.msra.mxu0 0.0
        %1176 = vmatprep.subr.mxu0 0.0
        %1177 = vmatpush1.msra.mxu0 0.0
        %1178 = vmatprep.subr.mxu0 0.0
        %1179 = vmatpush1.msra.mxu0 0.0
        %1180 = vmatprep.subr.mxu0 0.0
        %1181 = vmatpush1.msra.mxu0 0.0
        %1182 = vmatprep.subr.mxu0 0.0
        %1183 = vmatpush1.msra.mxu0 0.0
        %1184 = vmatprep.subr.mxu0 0.0
        %1185 = vmatpush1.msra.mxu0 0.0
        %1186 = vmatprep.subr.mxu0 0.0
        %1187 = vmatpush1.msra.mxu0 0.0
        %1188 = vmatprep.subr.mxu0 0.0
        %1189 = vmatpush1.msra.mxu0 0.0
        %1190 = vmatprep.subr.mxu0 0.0
        %1191 = vmatpush1.msra.mxu0 0.0
        %1192 = vmatprep.subr.mxu0 0.0
        %1193 = vmatpush1.msra.mxu0 0.0
        %1194 = vmatprep.subr.mxu0 0.0
        %1195 = vmatpush1.msra.mxu0 0.0
        %1196 = vmatprep.subr.mxu0 0.0
        %1197 = vmatpush1.msra.mxu0 0.0
        %1198 = vmatprep.subr.mxu0 0.0
        %1199 = vmatpush1.msra.mxu0 0.0
        %1200 = vmatprep.mubr.f32.mxu0 0.0
        %1201 = vmatmul.mubr.f32.gmra.mrb[0].mxu0 %v1113
        %v1202 = vpop.f32.mrb[0].mxu0
        %v1203 = vadd.f32 %v1074, %v1202
        %v1204 = vpop.f32.mrb[0].mxu0
        %1205 = vmatprep.mubr.f32.mxu0 0.0
        %1206 = vmatmul.mubr.f32.gmra.mrb[0].mxu0 %v1116
        %v1207 = vpop.f32.mrb[0].mxu0
        %v1208 = vadd.f32 %v1079, %v1207
        %v1209 = vpop.f32.mrb[0].mxu0
        %1210 = vmatprep.mubr.f32.mxu0 0.0
        %1211 = vmatmul.mubr.f32.gmra.mrb[0].mxu0 %v1119
        %v1212 = vpop.f32.mrb[0].mxu0
        %v1213 = vadd.f32 %v1084, %v1212
        %v1214 = vpop.f32.mrb[0].mxu0
        %1215 = vmatprep.mubr.f32.mxu0 0.0
        %1216 = vmatmul.mubr.f32.gmra.mrb[0].mxu0 %v1122
        %v1217 = vpop.f32.mrb[0].mxu0
        %v1218 = vadd.f32 %v1089, %v1217
        %v1219 = vpop.f32.mrb[0].mxu0
        %1220 = vmatprep.mubr.f32.mxu0 0.0
        %1221 = vmatmul.mubr.f32.gmra.mrb[0].mxu0 %v1125
        %v1222 = vpop.f32.mrb[0].mxu0
        %v1223 = vadd.f32 %v1094, %v1222
        %v1224 = vpop.f32.mrb[0].mxu0
        %1225 = vmatprep.mubr.f32.mxu0 0.0
        %1226 = vmatmul.mubr.f32.gmra.mrb[0].mxu0 %v1128
        %v1227 = vpop.f32.mrb[0].mxu0
        %v1228 = vadd.f32 %v1099, %v1227
        %v1229 = vpop.f32.mrb[0].mxu0
        %1230 = vmatprep.mubr.f32.mxu0 0.0
        %1231 = vmatmul.mubr.f32.gmra.mrb[0].mxu0 %v1131
        %v1232 = vpop.f32.mrb[0].mxu0
        %v1233 = vadd.f32 %v1104, %v1232
        %v1234 = vpop.f32.mrb[0].mxu0
        %1235 = vmatprep.mubr.f32.mxu0 0.0
        %1236 = vmatmul.mubr.f32.gmra.mrb[0].mxu0 %v1134
        %v1237 = vpop.f32.mrb[0].mxu0
        %v1238 = vadd.f32 %v1109, %v1237
        %v1239 = vpop.f32.mrb[0].mxu0
        %1240 = vdwg.mxu0
        %v1242 = vlaneseq
        %v1243 = vshrl.u32 %v1242, 7
        %v1244 = vsub.s32 0, %v1243
        %v1245 = vrot.slane %v862, %v1244
        %v1247 = vadd.f32 %v1203, %v1245
        %v1248 = vadd.f32 %v1208, %v1245
        %v1249 = vadd.f32 %v1213, %v1245
        %v1250 = vadd.f32 %v1218, %v1245
        %v1251 = vadd.f32 %v1223, %v1245
        %v1252 = vadd.f32 %v1228, %v1245
        %v1253 = vadd.f32 %v1233, %v1245
        %v1254 = vadd.f32 %v1238, %v1245
        %v1255 = vmax.f32 %v1247, 0.0
        %v1256 = vmax.f32 %v1248, 0.0
        %v1257 = vmax.f32 %v1249, 0.0
        %v1258 = vmax.f32 %v1250, 0.0
        %v1259 = vmax.f32 %v1251, 0.0
        %v1260 = vmax.f32 %v1252, 0.0
        %v1261 = vmax.f32 %v1253, 0.0
        %v1262 = vmax.f32 %v1254, 0.0
        %v1263 = vld [vmem:[%s7] sm:$0xff]
        %v1264 = vld [vmem:[%s7 + $0x8] sm:$0xff]
        %v1265 = vld [vmem:[%s7 + $0x10] sm:$0xff]
        %v1266 = vld [vmem:[%s7 + $0x18] sm:$0xff]
        %v1267 = vld [vmem:[%s8] sm:$0xff]
        %v1268 = vld [vmem:[%s8 + $0x8] sm:$0xff]
        %v1269 = vld [vmem:[%s8 + $0x10] sm:$0xff]
        %v1270 = vld [vmem:[%s8 + $0x18] sm:$0xff]
        %v1271 = vld [vmem:[%s9] sm:$0x1]
        %1272 = vmatprep.subr.mxu0 0.0
        %1273 = vmatpush1.msra.mxu0 %v1255
        %1274 = vmatprep.subr.mxu0 0.0
        %1275 = vmatpush1.msra.mxu0 %v1256
        %1276 = vmatprep.subr.mxu0 0.0
        %1277 = vmatpush1.msra.mxu0 %v1257
        %1278 = vmatprep.subr.mxu0 0.0
        %1279 = vmatpush1.msra.mxu0 %v1258
        %1280 = vmatprep.subr.mxu0 0.0
        %1281 = vmatpush1.msra.mxu0 %v1259
        %1282 = vmatprep.subr.mxu0 0.0
        %1283 = vmatpush1.msra.mxu0 %v1260
        %1284 = vmatprep.subr.mxu0 0.0
        %1285 = vmatpush1.msra.mxu0 %v1261
        %1286 = vmatprep.subr.mxu0 0.0
        %1287 = vmatpush1.msra.mxu0 %v1262
        %1288 = vmatprep.subr.mxu0 0.0
        %1289 = vmatpush1.msra.mxu0 0.0
        %1290 = vmatprep.subr.mxu0 0.0
        %1291 = vmatpush1.msra.mxu0 0.0
        %1292 = vmatprep.subr.mxu0 0.0
        %1293 = vmatpush1.msra.mxu0 0.0
        %1294 = vmatprep.subr.mxu0 0.0
        %1295 = vmatpush1.msra.mxu0 0.0
        %1296 = vmatprep.subr.mxu0 0.0
        %1297 = vmatpush1.msra.mxu0 0.0
        %1298 = vmatprep.subr.mxu0 0.0
        %1299 = vmatpush1.msra.mxu0 0.0
        %1300 = vmatprep.subr.mxu0 0.0
        %1301 = vmatpush1.msra.mxu0 0.0
        %1302 = vmatprep.subr.mxu0 0.0
        %1303 = vmatpush1.msra.mxu0 0.0
        %1304 = vmatprep.subr.mxu0 0.0
        %1305 = vmatpush1.msra.mxu0 0.0
        %1306 = vmatprep.subr.mxu0 0.0
        %1307 = vmatpush1.msra.mxu0 0.0
        %1308 = vmatprep.subr.mxu0 0.0
        %1309 = vmatpush1.msra.mxu0 0.0
        %1310 = vmatprep.subr.mxu0 0.0
        %1311 = vmatpush1.msra.mxu0 0.0
        %1312 = vmatprep.subr.mxu0 0.0
        %1313 = vmatpush1.msra.mxu0 0.0
        %1314 = vmatprep.subr.mxu0 0.0
        %1315 = vmatpush1.msra.mxu0 0.0
        %1316 = vmatprep.subr.mxu0 0.0
        %1317 = vmatpush1.msra.mxu0 0.0
        %1318 = vmatprep.subr.mxu0 0.0
        %1319 = vmatpush1.msra.mxu0 0.0
        %1320 = vmatprep.subr.mxu0 0.0
        %1321 = vmatpush1.msra.mxu0 0.0
        %1322 = vmatprep.subr.mxu0 0.0
        %1323 = vmatpush1.msra.mxu0 0.0
        %1324 = vmatprep.subr.mxu0 0.0
        %1325 = vmatpush1.msra.mxu0 0.0
        %1326 = vmatprep.subr.mxu0 0.0
        %1327 = vmatpush1.msra.mxu0 0.0
        %1328 = vmatprep.subr.mxu0 0.0
        %1329 = vmatpush1.msra.mxu0 0.0
        %1330 = vmatprep.subr.mxu0 0.0
        %1331 = vmatpush1.msra.mxu0 0.0
        %1332 = vmatprep.subr.mxu0 0.0
        %1333 = vmatpush1.msra.mxu0 0.0
        %1334 = vmatprep.subr.mxu0 0.0
        %1335 = vmatpush1.msra.mxu0 0.0
        %1336 = vmatprep.mubr.f32.mxu0 0.0
        %1337 = vmatmul.mubr.f32.gmra.mrb[0].mxu0 %v427
        %v1338 = vpop.f32.mrb[0].mxu0
        %v1339 = vadd.f32 0.0, %v1338
        %v1340 = vpop.f32.mrb[0].mxu0
        %1341 = vdwg.mxu0
        %v1343 = vsel %vm933, %v1339, 0
        %1345 = vmatprep.subr.mxu0 0.0
        %1346 = vmatpush1.msra.mxu0 %v1267
        %1347 = vmatprep.subr.mxu0 0.0
        %1348 = vmatpush1.msra.mxu0 %v1268
        %1349 = vmatprep.subr.mxu0 0.0
        %1350 = vmatpush1.msra.mxu0 %v1269
        %1351 = vmatprep.subr.mxu0 0.0
        %1352 = vmatpush1.msra.mxu0 %v1270
        %1353 = vmatprep.subr.mxu0 0.0
        %1354 = vmatpush1.msra.mxu0 0.0
        %1355 = vmatprep.subr.mxu0 0.0
        %1356 = vmatpush1.msra.mxu0 0.0
        %1357 = vmatprep.subr.mxu0 0.0
        %1358 = vmatpush1.msra.mxu0 0.0
        %1359 = vmatprep.subr.mxu0 0.0
        %1360 = vmatpush1.msra.mxu0 0.0
        %1361 = vmatprep.subr.mxu0 0.0
        %1362 = vmatpush1.msra.mxu0 0.0
        %1363 = vmatprep.subr.mxu0 0.0
        %1364 = vmatpush1.msra.mxu0 0.0
        %1365 = vmatprep.subr.mxu0 0.0
        %1366 = vmatpush1.msra.mxu0 0.0
        %1367 = vmatprep.subr.mxu0 0.0
        %1368 = vmatpush1.msra.mxu0 0.0
        %1369 = vmatprep.subr.mxu0 0.0
        %1370 = vmatpush1.msra.mxu0 0.0
        %1371 = vmatprep.subr.mxu0 0.0
        %1372 = vmatpush1.msra.mxu0 0.0
        %1373 = vmatprep.subr.mxu0 0.0
        %1374 = vmatpush1.msra.mxu0 0.0
        %1375 = vmatprep.subr.mxu0 0.0
        %1376 = vmatpush1.msra.mxu0 0.0
        %1377 = vmatprep.subr.mxu0 0.0
        %1378 = vmatpush1.msra.mxu0 0.0
        %1379 = vmatprep.subr.mxu0 0.0
        %1380 = vmatpush1.msra.mxu0 0.0
        %1381 = vmatprep.subr.mxu0 0.0
        %1382 = vmatpush1.msra.mxu0 0.0
        %1383 = vmatprep.subr.mxu0 0.0
        %1384 = vmatpush1.msra.mxu0 0.0
        %1385 = vmatprep.subr.mxu0 0.0
        %1386 = vmatpush1.msra.mxu0 0.0
        %1387 = vmatprep.subr.mxu0 0.0
        %1388 = vmatpush1.msra.mxu0 0.0
        %1389 = vmatprep.subr.mxu0 0.0
        %1390 = vmatpush1.msra.mxu0 0.0
        %1391 = vmatprep.subr.mxu0 0.0
        %1392 = vmatpush1.msra.mxu0 0.0
        %1393 = vmatprep.subr.mxu0 0.0
        %1394 = vmatpush1.msra.mxu0 0.0
        %1395 = vmatprep.subr.mxu0 0.0
        %1396 = vmatpush1.msra.mxu0 0.0
        %1397 = vmatprep.subr.mxu0 0.0
        %1398 = vmatpush1.msra.mxu0 0.0
        %1399 = vmatprep.subr.mxu0 0.0
        %1400 = vmatpush1.msra.mxu0 0.0
        %1401 = vmatprep.subr.mxu0 0.0
        %1402 = vmatpush1.msra.mxu0 0.0
        %1403 = vmatprep.subr.mxu0 0.0
        %1404 = vmatpush1.msra.mxu0 0.0
        %1405 = vmatprep.subr.mxu0 0.0
        %1406 = vmatpush1.msra.mxu0 0.0
        %1407 = vmatprep.subr.mxu0 0.0
        %1408 = vmatpush1.msra.mxu0 0.0
        %1409 = vmatprep.mubr.f32.mxu0 0.0
        %1410 = vmatmul.mubr.f32.gmra.mrb[0].mxu0 %v1343
        %v1411 = vpop.f32.mrb[0].mxu0
        %v1412 = vadd.f32 0.0, %v1411
        %v1413 = vpop.f32.mrb[0].mxu0
        %1414 = vdwg.mxu0
        %1415 = vmatprep.subr.mxu0 0.0
        %1416 = vmatpush1.msra.mxu0 %v1412
        %1417 = vmatprep.subr.mxu0 0.0
        %1418 = vmatpush1.msra.mxu0 0.0
        %1419 = vmatprep.subr.mxu0 0.0
        %1420 = vmatpush1.msra.mxu0 0.0
        %1421 = vmatprep.subr.mxu0 0.0
        %1422 = vmatpush1.msra.mxu0 0.0
        %1423 = vmatprep.subr.mxu0 0.0
        %1424 = vmatpush1.msra.mxu0 0.0
        %1425 = vmatprep.subr.mxu0 0.0
        %1426 = vmatpush1.msra.mxu0 0.0
        %1427 = vmatprep.subr.mxu0 0.0
        %1428 = vmatpush1.msra.mxu0 0.0
        %1429 = vmatprep.subr.mxu0 0.0
        %1430 = vmatpush1.msra.mxu0 0.0
        %1431 = vmatprep.subr.mxu0 0.0
        %1432 = vmatpush1.msra.mxu0 0.0
        %1433 = vmatprep.subr.mxu0 0.0
        %1434 = vmatpush1.msra.mxu0 0.0
        %1435 = vmatprep.subr.mxu0 0.0
        %1436 = vmatpush1.msra.mxu0 0.0
        %1437 = vmatprep.subr.mxu0 0.0
        %1438 = vmatpush1.msra.mxu0 0.0
        %1439 = vmatprep.subr.mxu0 0.0
        %1440 = vmatpush1.msra.mxu0 0.0
        %1441 = vmatprep.subr.mxu0 0.0
        %1442 = vmatpush1.msra.mxu0 0.0
        %1443 = vmatprep.subr.mxu0 0.0
        %1444 = vmatpush1.msra.mxu0 0.0
        %1445 = vmatprep.subr.mxu0 0.0
        %1446 = vmatpush1.msra.mxu0 0.0
        %1447 = vmatprep.subr.mxu0 0.0
        %1448 = vmatpush1.msra.mxu0 0.0
        %1449 = vmatprep.subr.mxu0 0.0
        %1450 = vmatpush1.msra.mxu0 0.0
        %1451 = vmatprep.subr.mxu0 0.0
        %1452 = vmatpush1.msra.mxu0 0.0
        %1453 = vmatprep.subr.mxu0 0.0
        %1454 = vmatpush1.msra.mxu0 0.0
        %1455 = vmatprep.subr.mxu0 0.0
        %1456 = vmatpush1.msra.mxu0 0.0
        %1457 = vmatprep.subr.mxu0 0.0
        %1458 = vmatpush1.msra.mxu0 0.0
        %1459 = vmatprep.subr.mxu0 0.0
        %1460 = vmatpush1.msra.mxu0 0.0
        %1461 = vmatprep.subr.mxu0 0.0
        %1462 = vmatpush1.msra.mxu0 0.0
        %1463 = vmatprep.subr.mxu0 0.0
        %1464 = vmatpush1.msra.mxu0 0.0
        %1465 = vmatprep.subr.mxu0 0.0
        %1466 = vmatpush1.msra.mxu0 0.0
        %1467 = vmatprep.subr.mxu0 0.0
        %1468 = vmatpush1.msra.mxu0 0.0
        %1469 = vmatprep.subr.mxu0 0.0
        %1470 = vmatpush1.msra.mxu0 0.0
        %1471 = vmatprep.subr.mxu0 0.0
        %1472 = vmatpush1.msra.mxu0 0.0
        %1473 = vmatprep.subr.mxu0 0.0
        %1474 = vmatpush1.msra.mxu0 0.0
        %1475 = vmatprep.subr.mxu0 0.0
        %1476 = vmatpush1.msra.mxu0 0.0
        %1477 = vmatprep.subr.mxu0 0.0
        %1478 = vmatpush1.msra.mxu0 0.0
        %1479 = vmatprep.mubr.f32.mxu0 0.0
        %1480 = vmatmul.mubr.f32.gmra.mrb[0].mxu0 %v575
        %v1481 = vpop.f32.mrb[0].mxu0
        %v1482 = vadd.f32 0.0, %v1481
        %v1483 = vpop.f32.mrb[0].mxu0
        %1484 = vmatprep.mubr.f32.mxu0 0.0
        %1485 = vmatmul.mubr.f32.gmra.mrb[0].mxu0 %v578
        %v1486 = vpop.f32.mrb[0].mxu0
        %v1487 = vadd.f32 0.0, %v1486
        %v1488 = vpop.f32.mrb[0].mxu0
        %1489 = vmatprep.mubr.f32.mxu0 0.0
        %1490 = vmatmul.mubr.f32.gmra.mrb[0].mxu0 %v581
        %v1491 = vpop.f32.mrb[0].mxu0
        %v1492 = vadd.f32 0.0, %v1491
        %v1493 = vpop.f32.mrb[0].mxu0
        %1494 = vmatprep.mubr.f32.mxu0 0.0
        %1495 = vmatmul.mubr.f32.gmra.mrb[0].mxu0 %v584
        %v1496 = vpop.f32.mrb[0].mxu0
        %v1497 = vadd.f32 0.0, %v1496
        %v1498 = vpop.f32.mrb[0].mxu0
        %1499 = vmatprep.mubr.f32.mxu0 0.0
        %1500 = vmatmul.mubr.f32.gmra.mrb[0].mxu0 %v587
        %v1501 = vpop.f32.mrb[0].mxu0
        %v1502 = vadd.f32 0.0, %v1501
        %v1503 = vpop.f32.mrb[0].mxu0
        %1504 = vmatprep.mubr.f32.mxu0 0.0
        %1505 = vmatmul.mubr.f32.gmra.mrb[0].mxu0 %v590
        %v1506 = vpop.f32.mrb[0].mxu0
        %v1507 = vadd.f32 0.0, %v1506
        %v1508 = vpop.f32.mrb[0].mxu0
        %1509 = vmatprep.mubr.f32.mxu0 0.0
        %1510 = vmatmul.mubr.f32.gmra.mrb[0].mxu0 %v593
        %v1511 = vpop.f32.mrb[0].mxu0
        %v1512 = vadd.f32 0.0, %v1511
        %v1513 = vpop.f32.mrb[0].mxu0
        %1514 = vmatprep.mubr.f32.mxu0 0.0
        %1515 = vmatmul.mubr.f32.gmra.mrb[0].mxu0 %v596
        %v1516 = vpop.f32.mrb[0].mxu0
        %v1517 = vadd.f32 0.0, %v1516
        %v1518 = vpop.f32.mrb[0].mxu0
        %1519 = vdwg.mxu0
        %v1521 = vsel %vm933, %v1255, 0
        %v1524 = vsel %vm933, %v1256, 0
        %v1527 = vsel %vm933, %v1257, 0
        %v1530 = vsel %vm933, %v1258, 0
        %v1533 = vsel %vm933, %v1259, 0
        %v1536 = vsel %vm933, %v1260, 0
        %v1539 = vsel %vm933, %v1261, 0
        %v1542 = vsel %vm933, %v1262, 0
        %1544 = vmatprep.subr.mxu0 0.0
        %1545 = vmatpush1.msra.mxu0 %v1263
        %1546 = vmatprep.subr.mxu0 0.0
        %1547 = vmatpush1.msra.mxu0 %v1264
        %1548 = vmatprep.subr.mxu0 0.0
        %1549 = vmatpush1.msra.mxu0 %v1265
        %1550 = vmatprep.subr.mxu0 0.0
        %1551 = vmatpush1.msra.mxu0 %v1266
        %1552 = vmatprep.subr.mxu0 0.0
        %1553 = vmatpush1.msra.mxu0 0.0
        %1554 = vmatprep.subr.mxu0 0.0
        %1555 = vmatpush1.msra.mxu0 0.0
        %1556 = vmatprep.subr.mxu0 0.0
        %1557 = vmatpush1.msra.mxu0 0.0
        %1558 = vmatprep.subr.mxu0 0.0
        %1559 = vmatpush1.msra.mxu0 0.0
        %1560 = vmatprep.subr.mxu0 0.0
        %1561 = vmatpush1.msra.mxu0 0.0
        %1562 = vmatprep.subr.mxu0 0.0
        %1563 = vmatpush1.msra.mxu0 0.0
        %1564 = vmatprep.subr.mxu0 0.0
        %1565 = vmatpush1.msra.mxu0 0.0
        %1566 = vmatprep.subr.mxu0 0.0
        %1567 = vmatpush1.msra.mxu0 0.0
        %1568 = vmatprep.subr.mxu0 0.0
        %1569 = vmatpush1.msra.mxu0 0.0
        %1570 = vmatprep.subr.mxu0 0.0
        %1571 = vmatpush1.msra.mxu0 0.0
        %1572 = vmatprep.subr.mxu0 0.0
        %1573 = vmatpush1.msra.mxu0 0.0
        %1574 = vmatprep.subr.mxu0 0.0
        %1575 = vmatpush1.msra.mxu0 0.0
        %1576 = vmatprep.subr.mxu0 0.0
        %1577 = vmatpush1.msra.mxu0 0.0
        %1578 = vmatprep.subr.mxu0 0.0
        %1579 = vmatpush1.msra.mxu0 0.0
        %1580 = vmatprep.subr.mxu0 0.0
        %1581 = vmatpush1.msra.mxu0 0.0
        %1582 = vmatprep.subr.mxu0 0.0
        %1583 = vmatpush1.msra.mxu0 0.0
        %1584 = vmatprep.subr.mxu0 0.0
        %1585 = vmatpush1.msra.mxu0 0.0
        %1586 = vmatprep.subr.mxu0 0.0
        %1587 = vmatpush1.msra.mxu0 0.0
        %1588 = vmatprep.subr.mxu0 0.0
        %1589 = vmatpush1.msra.mxu0 0.0
        %1590 = vmatprep.subr.mxu0 0.0
        %1591 = vmatpush1.msra.mxu0 0.0
        %1592 = vmatprep.subr.mxu0 0.0
        %1593 = vmatpush1.msra.mxu0 0.0
        %1594 = vmatprep.subr.mxu0 0.0
        %1595 = vmatpush1.msra.mxu0 0.0
        %1596 = vmatprep.subr.mxu0 0.0
        %1597 = vmatpush1.msra.mxu0 0.0
        %1598 = vmatprep.subr.mxu0 0.0
        %1599 = vmatpush1.msra.mxu0 0.0
        %1600 = vmatprep.subr.mxu0 0.0
        %1601 = vmatpush1.msra.mxu0 0.0
        %1602 = vmatprep.subr.mxu0 0.0
        %1603 = vmatpush1.msra.mxu0 0.0
        %1604 = vmatprep.subr.mxu0 0.0
        %1605 = vmatpush1.msra.mxu0 0.0
        %1606 = vmatprep.subr.mxu0 0.0
        %1607 = vmatpush1.msra.mxu0 0.0
        %1608 = vmatprep.mubr.f32.mxu0 0.0
        %1609 = vmatmul.mubr.f32.gmra.mrb[0].mxu0 %v1521
        %v1610 = vpop.f32.mrb[0].mxu0
        %v1611 = vadd.f32 %v1482, %v1610
        %v1612 = vpop.f32.mrb[0].mxu0
        %1613 = vmatprep.mubr.f32.mxu0 0.0
        %1614 = vmatmul.mubr.f32.gmra.mrb[0].mxu0 %v1524
        %v1615 = vpop.f32.mrb[0].mxu0
        %v1616 = vadd.f32 %v1487, %v1615
        %v1617 = vpop.f32.mrb[0].mxu0
        %1618 = vmatprep.mubr.f32.mxu0 0.0
        %1619 = vmatmul.mubr.f32.gmra.mrb[0].mxu0 %v1527
        %v1620 = vpop.f32.mrb[0].mxu0
        %v1621 = vadd.f32 %v1492, %v1620
        %v1622 = vpop.f32.mrb[0].mxu0
        %1623 = vmatprep.mubr.f32.mxu0 0.0
        %1624 = vmatmul.mubr.f32.gmra.mrb[0].mxu0 %v1530
        %v1625 = vpop.f32.mrb[0].mxu0
        %v1626 = vadd.f32 %v1497, %v1625
        %v1627 = vpop.f32.mrb[0].mxu0
        %1628 = vmatprep.mubr.f32.mxu0 0.0
        %1629 = vmatmul.mubr.f32.gmra.mrb[0].mxu0 %v1533
        %v1630 = vpop.f32.mrb[0].mxu0
        %v1631 = vadd.f32 %v1502, %v1630
        %v1632 = vpop.f32.mrb[0].mxu0
        %1633 = vmatprep.mubr.f32.mxu0 0.0
        %1634 = vmatmul.mubr.f32.gmra.mrb[0].mxu0 %v1536
        %v1635 = vpop.f32.mrb[0].mxu0
        %v1636 = vadd.f32 %v1507, %v1635
        %v1637 = vpop.f32.mrb[0].mxu0
        %1638 = vmatprep.mubr.f32.mxu0 0.0
        %1639 = vmatmul.mubr.f32.gmra.mrb[0].mxu0 %v1539
        %v1640 = vpop.f32.mrb[0].mxu0
        %v1641 = vadd.f32 %v1512, %v1640
        %v1642 = vpop.f32.mrb[0].mxu0
        %1643 = vmatprep.mubr.f32.mxu0 0.0
        %1644 = vmatmul.mubr.f32.gmra.mrb[0].mxu0 %v1542
        %v1645 = vpop.f32.mrb[0].mxu0
        %v1646 = vadd.f32 %v1517, %v1645
        %v1647 = vpop.f32.mrb[0].mxu0
        %1648 = vdwg.mxu0
        %v1650 = vlaneseq
        %v1651 = vshrl.u32 %v1650, 7
        %v1652 = vsub.s32 0, %v1651
        %v1653 = vrot.slane %v1271, %v1652
        %v1655 = vadd.f32 %v1611, %v1653
        %v1656 = vadd.f32 %v1616, %v1653
        %v1657 = vadd.f32 %v1621, %v1653
        %v1658 = vadd.f32 %v1626, %v1653
        %v1659 = vadd.f32 %v1631, %v1653
        %v1660 = vadd.f32 %v1636, %v1653
        %v1661 = vadd.f32 %v1641, %v1653
        %v1662 = vadd.f32 %v1646, %v1653
        %v1663 = vmax.f32 %v1655, 0.0
        %v1664 = vmax.f32 %v1656, 0.0
        %v1665 = vmax.f32 %v1657, 0.0
        %v1666 = vmax.f32 %v1658, 0.0
        %v1667 = vmax.f32 %v1659, 0.0
        %v1668 = vmax.f32 %v1660, 0.0
        %v1669 = vmax.f32 %v1661, 0.0
        %v1670 = vmax.f32 %v1662, 0.0
        %1671 = vst [vmem:[%s353] sm:$0xff] %v1663
        %1672 = vst [vmem:[%s353 + $0x8] sm:$0xff] %v1664
        %1673 = vst [vmem:[%s353 + $0x10] sm:$0xff] %v1665
        %1674 = vst [vmem:[%s353 + $0x18] sm:$0xff] %v1666
        %1675 = vst [vmem:[%s353 + $0x20] sm:$0xff] %v1667
        %1676 = vst [vmem:[%s353 + $0x28] sm:$0xff] %v1668
        %1677 = vst [vmem:[%s353 + $0x30] sm:$0xff] %v1669
        %1678 = vst [vmem:[%s353 + $0x38] sm:$0xff] %v1670
        %s1679 = sand.u32 %s247, 1
        %s1680 = scalar_lea.sflag [#allocation3], %s1679
        %s1681 = sand.u32 %s247, 1
        %s1682 = smul.addr %s1681, 64
        %s1683 = scalar_lea.vmem [#allocation2], %s1682
        // Predicated region
        $region61: #{tpu_custom_call.1} parent=59 // pred_check
          %p1684 = pneg %p257
        $region62: #{tpu_custom_call.1} parent=59 // pred_check_branch
          %1686 = sbr.rel (%p1684) target = $region64
        $region63: #{tpu_custom_call.1} parent=59 // pred_region
          %s1687 = smul.u32 8, %s24
          %s1689 = ssub.s32 1024, 1024
          %1690 = vsyncadd %s1680, %s1689
          %s1691 = smul.addr %s1687, 128
          %s1692 = scalar_lea.hbm %s10, %s1691
          %s1693 = sshll.u32 %s1683, 4
          %s1694 = int_to_ptr.vmem [resolvable:$true] %s1693
          %1699 = dma.vmem_to_hbm [thread:$0]  %s1694, 1024, %s1692, %s1680, 128, 128, 8
        $region64: #{tpu_custom_call.1} parent=59 // pred_fallthru
          _
      $region60: #{tpu_custom_call.1} parent=5 // pred_fallthru
        _
      %p1700 = scmp.le.s32.totalorder 2, %s19
      // Predicated region
      $region65: #{tpu_custom_call.1} parent=5 // pred_check
        %p1701 = pneg %p1700
      $region66: #{tpu_custom_call.1} parent=5 // pred_check_branch
        %1703 = sbr.rel (%p1701) target = $region68
      $region67: #{tpu_custom_call.1} parent=5 // pred_region
        %s1704 = ssub.s32 %s19, 2
        // Predicated region
        $region69: #{tpu_custom_call.1} parent=67 // pred_check
          %p1705 = pneg %p263
        $region70: #{tpu_custom_call.1} parent=67 // pred_check_branch
          %1707 = sbr.rel (%p1705) target = $region72
        $region71: #{tpu_custom_call.1} parent=67 // pred_region
          %s1708 = sand.u32 %s248, 1
          %s1709 = scalar_lea.sflag [#allocation3], %s1708
          %s1710 = sand.u32 %s248, 1
          %s1711 = smul.addr %s1710, 64
          %s1712 = scalar_lea.vmem [#allocation2], %s1711
          %1713 = dma.done %s1709, 1024
        $region72: #{tpu_custom_call.1} parent=67 // pred_fallthru
          _
      $region68: #{tpu_custom_call.1} parent=5 // pred_fallthru
        _
    $region6: #{tpu_custom_call.1} parent=1 // loop_footer
      %s23 = sadd.s32 1, %s19
    $region7: #{tpu_custom_call.1} parent=1 // loop_footer_branch
      %18 = sbr.rel target = $region3
    $region8: #{tpu_custom_call.1} parent=1 // loop_exit
      _
    %1714 = vsyncpa [#allocation3], 1
    %s1715 = scalar_lea.sflag [#allocation3], 1
    %1716 = vsyncpa %s1715, 1

</llo_original>
